<compile_context>
chip_gen: v6e
topology: v6e:2x2x1
jax: 0.10.0
libtpu: 0.0.40
codegen_flags: <defaults>
</compile_context>

<pallas_src>
from functools import partial

import numpy as np
import jax
import jax.numpy as jnp
from jax import lax
from jax.experimental import pallas as pl
from jax.experimental.pallas import tpu as pltpu

BIAS_FINAL_INIT = 0.0003
WEIGHTS_FINAL_INIT = 0.003

LANE = 128      # f32 lane width
SUBLANE = 8     # f32 sublane width


def _round_up(n, m):
    return ((n + m - 1) // m) * m


def _make_actor_kernel(h1_pad, h2_pad, out_size):
    """Kernel over one batch tile; static widths are closure vars."""

    def actor_kernel(x_ref, w1_ref, w2_ref, w3_ref, bias_ref, o_ref):
        x = x_ref[...]

        # Packed (8, W) slab: row 0 = b1, row 1 = b2, row 2 = b3, row 3 = high/2.
        b1 = bias_ref[0:1, :h1_pad]
        b2 = bias_ref[1:2, :h2_pad]
        b3 = bias_ref[2:3, :out_size]
        high_half = bias_ref[3:4, :out_size]

        h1 = jnp.dot(x, w1_ref[...], preferred_element_type=jnp.float32,
                     precision=lax.Precision.HIGHEST) + b1
        h1 = jnp.maximum(h1, 0.0)

        h2 = jnp.dot(h1, w2_ref[...], preferred_element_type=jnp.float32,
                     precision=lax.Precision.HIGHEST) + b2
        h2 = jnp.maximum(h2, 0.0)

        a = jnp.tanh(jnp.dot(h2, w3_ref[...], preferred_element_type=jnp.float32,
                             precision=lax.Precision.HIGHEST) + b3)

        # (1 + a) * high / 2  ==  a * high_half + high_half   (single FMA)
        o_ref[...] = a * high_half + high_half

    return actor_kernel


def prepare_actor_params(params, high_action_limit):
    """One-time prep (hoisted out of the per-call path): pad weights to lane
    multiples where needed and pack biases + high_action_limit/2 into a single
    (8, W) f32 slab (one DMA instead of four)."""
    w1, b1, w2, b2, w3, b3 = params
    in_size, h1_size = w1.shape
    h2_size = w2.shape[1]
    out_size = w3.shape[1]

    h1_pad = _round_up(h1_size, LANE)
    h2_pad = _round_up(h2_size, LANE)
    bias_w = max(h1_pad, h2_pad, _round_up(out_size, LANE))

    # Zero padding is exact for this net: relu(0)=0 and padded weight rows/cols
    # contribute nothing.
    w1_p = jnp.pad(w1.astype(jnp.float32), ((0, 0), (0, h1_pad - h1_size)))
    w2_p = jnp.pad(w2.astype(jnp.float32),
                   ((0, h1_pad - h1_size), (0, h2_pad - h2_size)))
    w3_p = jnp.pad(w3.astype(jnp.float32), ((0, h2_pad - h2_size), (0, 0)))

    high_half = 0.5 * jnp.asarray(high_action_limit, jnp.float32).reshape(-1)
    packed = jnp.zeros((SUBLANE, bias_w), jnp.float32)
    packed = packed.at[0, :h1_size].set(b1.reshape(-1).astype(jnp.float32))
    packed = packed.at[1, :h2_size].set(b2.reshape(-1).astype(jnp.float32))
    packed = packed.at[2, :out_size].set(b3.reshape(-1).astype(jnp.float32))
    packed = packed.at[3, :out_size].set(high_half)

    return (w1_p, w2_p, w3_p, packed)


@partial(jax.jit, static_argnames=("tile_m",))
def actor_forward(x, prepared, *, tile_m=512):
    """x: [B, input_size] f32.  prepared: output of prepare_actor_params.
    Returns [B, output_size] f32."""
    w1_p, w2_p, w3_p, packed = prepared
    B, in_size = x.shape
    h1_pad = w1_p.shape[1]
    h2_pad = w2_p.shape[1]
    out_size = w3_p.shape[1]
    bias_w = packed.shape[1]

    x = x.astype(jnp.float32)

    # Batch tiling: single full-dim block for small B; otherwise big tiles
    # (amortize per-step overhead) with an even step count so v7x's two
    # TensorCores get balanced work. No host-side batch padding — Pallas
    # clips the edge block and masks the edge writes.
    if B <= tile_m:
        tile_m = B
        num_m = 1
    else:
        tile_m = _round_up(tile_m, SUBLANE)
        num_m = pl.cdiv(B, tile_m)
        if num_m % 2 == 1:
            num_m += 1
            tile_m = _round_up(pl.cdiv(B, num_m), SUBLANE)
            num_m = pl.cdiv(B, tile_m)

    kernel = _make_actor_kernel(h1_pad, h2_pad, out_size)

    return pl.pallas_call(
        kernel,
        out_shape=jax.ShapeDtypeStruct((B, out_size), jnp.float32),
        grid=(num_m,),
        in_specs=[
            pl.BlockSpec((tile_m, in_size), lambda i: (i, 0)),   # x tile, unpadded feats
            pl.BlockSpec((in_size, h1_pad), lambda i: (0, 0)),   # W1 (VMEM-resident)
            pl.BlockSpec((h1_pad, h2_pad), lambda i: (0, 0)),    # W2 (VMEM-resident)
            pl.BlockSpec((h2_pad, out_size), lambda i: (0, 0)),  # W3 (VMEM-resident)
            pl.BlockSpec((SUBLANE, bias_w), lambda i: (0, 0)),   # biases + high/2 slab
        ],
        out_specs=pl.BlockSpec((tile_m, out_size), lambda i: (i, 0)),
        compiler_params=pltpu.CompilerParams(
            dimension_semantics=("parallel",)),
    )(x, w1_p, w2_p, w3_p, packed)


def init_actor_params(key, input_size, hidden_size, output_size):
    """Deterministic init mirroring the PyTorch module (weights stored [in, out]).

    fan_in_uniform_init uses tensor.size(-1): for a Linear weight (out, in)
    that is `in`; for its bias (out,) that is `out` (matching PyTorch quirk).
    """
    k1w, k1b, k2w, k2b, k3w, k3b = jax.random.split(key, 6)
    h1, h2 = hidden_size

    def u(k, shape, bound):
        return jax.random.uniform(k, shape, jnp.float32, -bound, bound)

    w1 = u(k1w, (input_size, h1), 1.0 / np.sqrt(input_size))
    b1 = u(k1b, (1, h1), 1.0 / np.sqrt(h1))
    w2 = u(k2w, (h1, h2), 1.0 / np.sqrt(h1))
    b2 = u(k2b, (1, h2), 1.0 / np.sqrt(h2))
    w3 = u(k3w, (h2, output_size), WEIGHTS_FINAL_INIT)
    b3 = u(k3b, (1, output_size), BIAS_FINAL_INIT)
    return (w1, b1, w2, b2, w3, b3)


if __name__ == "__main__":
    # Small shapes consistent with the module's forward (norm='none')
    batch = 8
    input_size = 16
    hidden_size = (32, 32)
    output_size = 4
    high_action_limit = np.array([2.0, 1.0, 0.5, 3.0], dtype=np.float32)

    key = jax.random.PRNGKey(0)
    kx, kp = jax.random.split(key)
    x = jax.random.normal(kx, (batch, input_size), jnp.float32)
    params = init_actor_params(kp, input_size, hidden_size, output_size)

    prepared = prepare_actor_params(params, high_action_limit)
    out = actor_forward(x, prepared)
    out = jax.block_until_ready(out)

    # Exact-f32 NumPy reference for the norm='none' forward path.
    w1, b1, w2, b2, w3, b3 = [np.asarray(p, np.float32) for p in params]
    xn = np.asarray(x, np.float32)
    h1 = np.maximum(xn @ w1 + b1, 0.0)
    h2 = np.maximum(h1 @ w2 + b2, 0.0)
    ref = (1.0 + np.tanh(h2 @ w3 + b3)) * high_action_limit[None, :] / 2.0

    assert out.shape == (batch, output_size)
    np.testing.assert_allclose(np.asarray(out), ref, rtol=1e-4, atol=1e-5)

    print("KERNEL_OK")
</pallas_src>

<mosaic_0001>
module attributes {stable_mosaic.version = 11 : i64} {
  func.func @actor_kernel(%arg0: i32, %arg1: memref<8x16xf32, #tpu.memory_space<vmem>>, %arg2: memref<16x128xf32, #tpu.memory_space<vmem>>, %arg3: memref<128x128xf32, #tpu.memory_space<vmem>>, %arg4: memref<128x4xf32, #tpu.memory_space<vmem>>, %arg5: memref<8x128xf32, #tpu.memory_space<vmem>>, %arg6: memref<8x4xf32, #tpu.memory_space<vmem>>) attributes {dimension_semantics = [#tpu.dimension_semantics<parallel>], iteration_bounds = array<i64: 1>, scalar_prefetch = 0 : i64, scratch_operands = 0 : i64, tpu.core_type = #tpu.core_type<tc>, window_params = [{transform_indices = @transform_0, window_bounds = array<i64: 8, 16>}, {pipeline_mode = #tpu.pipeline_mode<synchronous>, transform_indices = @transform_1, window_bounds = array<i64: 16, 128>}, {pipeline_mode = #tpu.pipeline_mode<synchronous>, transform_indices = @transform_2, window_bounds = array<i64: 128, 128>}, {pipeline_mode = #tpu.pipeline_mode<synchronous>, transform_indices = @transform_3, window_bounds = array<i64: 128, 4>}, {pipeline_mode = #tpu.pipeline_mode<synchronous>, transform_indices = @transform_4, window_bounds = array<i64: 8, 128>}, {transform_indices = @transform_5, window_bounds = array<i64: 8, 4>}]} {
    %c0 = arith.constant 0 : index
    %c0_0 = arith.constant 0 : index
    %0 = vector.load %arg1[%c0, %c0_0] : memref<8x16xf32, #tpu.memory_space<vmem>>, vector<8x16xf32>
    %c0_1 = arith.constant 0 : index
    %c0_2 = arith.constant 0 : index
    %1 = vector.load %arg5[%c0_1, %c0_2] : memref<8x128xf32, #tpu.memory_space<vmem>>, vector<1x128xf32>
    %c1 = arith.constant 1 : index
    %c0_3 = arith.constant 0 : index
    %2 = vector.load %arg5[%c1, %c0_3] : memref<8x128xf32, #tpu.memory_space<vmem>>, vector<1x128xf32>
    %c2 = arith.constant 2 : index
    %c0_4 = arith.constant 0 : index
    %3 = vector.load %arg5[%c2, %c0_4] : memref<8x128xf32, #tpu.memory_space<vmem>>, vector<1x4xf32>
    %c3 = arith.constant 3 : index
    %c0_5 = arith.constant 0 : index
    %4 = vector.load %arg5[%c3, %c0_5] : memref<8x128xf32, #tpu.memory_space<vmem>>, vector<1x4xf32>
    %c0_6 = arith.constant 0 : index
    %c0_7 = arith.constant 0 : index
    %5 = vector.load %arg2[%c0_6, %c0_7] : memref<16x128xf32, #tpu.memory_space<vmem>>, vector<16x128xf32>
    %cst = arith.constant dense<0.000000e+00> : vector<8x128xf32>
    %6 = tpu.matmul %0, %5, %cst {dimension_numbers = #tpu.dot_dimension_numbers<[1], [0], [0], [1], [0, 0, 1, 1], [], []>, precision = #tpu.contract_precision<fp32>} : vector<8x16xf32>, vector<16x128xf32>, vector<8x128xf32> -> vector<8x128xf32>
    %7 = vector.broadcast %1 : vector<1x128xf32> to vector<8x128xf32>
    %8 = arith.addf %6, %7 : vector<8x128xf32>
    %cst_8 = arith.constant 0.000000e+00 : f32
    %9 = vector.broadcast %cst_8 : f32 to vector<8x128xf32>
    %10 = arith.maximumf %8, %9 : vector<8x128xf32>
    %c0_9 = arith.constant 0 : index
    %c0_10 = arith.constant 0 : index
    %11 = vector.load %arg3[%c0_9, %c0_10] : memref<128x128xf32, #tpu.memory_space<vmem>>, vector<128x128xf32>
    %cst_11 = arith.constant dense<0.000000e+00> : vector<8x128xf32>
    %12 = tpu.matmul %10, %11, %cst_11 {dimension_numbers = #tpu.dot_dimension_numbers<[1], [0], [0], [1], [0, 0, 1, 1], [], []>, precision = #tpu.contract_precision<fp32>} : vector<8x128xf32>, vector<128x128xf32>, vector<8x128xf32> -> vector<8x128xf32>
    %13 = vector.broadcast %2 : vector<1x128xf32> to vector<8x128xf32>
    %14 = arith.addf %12, %13 : vector<8x128xf32>
    %cst_12 = arith.constant 0.000000e+00 : f32
    %15 = vector.broadcast %cst_12 : f32 to vector<8x128xf32>
    %16 = arith.maximumf %14, %15 : vector<8x128xf32>
    %c0_13 = arith.constant 0 : index
    %c0_14 = arith.constant 0 : index
    %17 = vector.load %arg4[%c0_13, %c0_14] : memref<128x4xf32, #tpu.memory_space<vmem>>, vector<128x4xf32>
    %cst_15 = arith.constant dense<0.000000e+00> : vector<8x4xf32>
    %18 = tpu.matmul %16, %17, %cst_15 {dimension_numbers = #tpu.dot_dimension_numbers<[1], [0], [0], [1], [0, 0, 1, 1], [], []>, precision = #tpu.contract_precision<fp32>} : vector<8x128xf32>, vector<128x4xf32>, vector<8x4xf32> -> vector<8x4xf32>
    %19 = vector.broadcast %3 : vector<1x4xf32> to vector<8x4xf32>
    %20 = arith.addf %18, %19 : vector<8x4xf32>
    %21 = math.tanh %20 : vector<8x4xf32>
    %22 = vector.broadcast %4 : vector<1x4xf32> to vector<8x4xf32>
    %23 = arith.mulf %21, %22 : vector<8x4xf32>
    %24 = vector.broadcast %4 : vector<1x4xf32> to vector<8x4xf32>
    %25 = arith.addf %23, %24 : vector<8x4xf32>
    %c0_16 = arith.constant 0 : index
    %c0_17 = arith.constant 0 : index
    %26 = vector.load %arg6[%c0_16, %c0_17] : memref<8x4xf32, #tpu.memory_space<vmem>>, vector<8x4xf32>
    tpu.vector_store %arg6[%c0_16, %c0_17], %25 {strides = array<i32>} : memref<8x4xf32, #tpu.memory_space<vmem>>, vector<8x4xf32>,
    return
  }
  func.func @transform_0(%arg0: i32) -> (i32, i32) {
    %c0_i32 = arith.constant 0 : i32
    %c0_i32_0 = arith.constant 0 : i32
    return %arg0, %c0_i32 : i32, i32
  }
  func.func @transform_1(%arg0: i32) -> (i32, i32) {
    %c0_i32 = arith.constant 0 : i32
    %c0_i32_0 = arith.constant 0 : i32
    %c0_i32_1 = arith.constant 0 : i32
    return %c0_i32, %c0_i32_0 : i32, i32
  }
  func.func @transform_2(%arg0: i32) -> (i32, i32) {
    %c0_i32 = arith.constant 0 : i32
    %c0_i32_0 = arith.constant 0 : i32
    %c0_i32_1 = arith.constant 0 : i32
    return %c0_i32, %c0_i32_0 : i32, i32
  }
  func.func @transform_3(%arg0: i32) -> (i32, i32) {
    %c0_i32 = arith.constant 0 : i32
    %c0_i32_0 = arith.constant 0 : i32
    %c0_i32_1 = arith.constant 0 : i32
    return %c0_i32, %c0_i32_0 : i32, i32
  }
  func.func @transform_4(%arg0: i32) -> (i32, i32) {
    %c0_i32 = arith.constant 0 : i32
    %c0_i32_0 = arith.constant 0 : i32
    %c0_i32_1 = arith.constant 0 : i32
    return %c0_i32, %c0_i32_0 : i32, i32
  }
  func.func @transform_5(%arg0: i32) -> (i32, i32) {
    %c0_i32 = arith.constant 0 : i32
    %c0_i32_0 = arith.constant 0 : i32
    return %arg0, %c0_i32 : i32, i32
  }
}

</mosaic_0001>

<llo_original>
// kernel: actor_forward.1
$region0: #{actor_forward.1}
  #allocation0 [shape = 'u32[]', space=smem, size = 0x4, offset = 0x4, fixed_abs, tag = 'smem constant byte address 0x4 - core index']
  #allocation1 [shape = 'u32[144,128]{1,0:T(1,128)}', space=vmem, size = 0x12000, scoped, tag = 'internal scratch']
  %s0 = inlined_call_operand.hbm [shape: f32[8,16], index: 0, kind: input, shape index: {}]
  %s1 = inlined_call_operand.hbm [shape: f32[16,128], index: 1, kind: input, shape index: {}]
  %s2 = inlined_call_operand.vmem [shape: f32[128,128], index: 2, kind: input, shape index: {}]
  %s3 = inlined_call_operand.vmem [shape: f32[128,4], index: 3, kind: input, shape index: {}]
  %s4 = inlined_call_operand.vmem [shape: f32[8,128], index: 4, kind: input, shape index: {}]
  %s5 = inlined_call_operand.vmem [shape: f32[8,4], index: 5, kind: output, shape index: {}]
  %s6 = sld [smem:[#allocation0]]
  $region38: #{actor_forward.1} parent=0
    _
  %s8 = ssub.s32 1, %s6
  %s9 = scalar_select 0, %s8, %s6
  $region1: #{actor_forward.1} parent=0
    #allocation2 [shape = 'u8[4096]{0}', space=vmem, size = 0x1000, scoped, tag = 'input window, operand 0, single buffered']
    #allocation3 [shape = 's32[1]{0}', space=sflag, size = 0x4, scoped, tag = 'scoped memory for actor_forward.1']
    #allocation4 [shape = 'u8[8192]{0}', space=vmem, size = 0x2000, scoped, tag = 'input window, operand 1, single buffered']
    #allocation5 [shape = 's32[1]{0}', space=sflag, size = 0x4, scoped, tag = 'scoped memory for actor_forward.1']
    %10 = vsyncpa [#allocation3], 0
    %11 = vsyncpa [#allocation5], 0
    // Predicated region
    $region2: #{actor_forward.1} parent=1 // pred_check
      _
    $region3: #{actor_forward.1} parent=1 // pred_check_branch
      %13 = sbr.rel (0) target = $region5
    $region4: #{actor_forward.1} parent=1 // pred_region
      %s15 = ssub.s32 128, 128
      %16 = vsyncadd [#allocation3], %s15
      %s18 = sshll.u32 [#allocation2], 4
      %s19 = int_to_ptr.vmem [resolvable:$true] %s18
      %21 = dma.hbm_to_vmem [thread:$0]  %s0, 128, %s19, [#allocation3]
    $region5: #{actor_forward.1} parent=1 // pred_fallthru
      _
    // Predicated region
    $region6: #{actor_forward.1} parent=1 // pred_check
      _
    $region7: #{actor_forward.1} parent=1 // pred_check_branch
      %23 = sbr.rel (0) target = $region9
    $region8: #{actor_forward.1} parent=1 // pred_region
      %s25 = ssub.s32 256, 256
      %26 = vsyncadd [#allocation5], %s25
      %s27 = sshll.u32 [#allocation4], 4
      %s28 = int_to_ptr.vmem [resolvable:$true] %s27
      %33 = dma.hbm_to_vmem [thread:$0]  %s1, 256, %s28, [#allocation5], 128, 128, 8
    $region9: #{actor_forward.1} parent=1 // pred_fallthru
      _
    // Predicated region
    $region10: #{actor_forward.1} parent=1 // pred_check
      _
    $region11: #{actor_forward.1} parent=1 // pred_check_branch
      %35 = sbr.rel (0) target = $region13
    $region12: #{actor_forward.1} parent=1 // pred_region
      _
    $region13: #{actor_forward.1} parent=1 // pred_fallthru
      _
    // Predicated region
    $region14: #{actor_forward.1} parent=1 // pred_check
      _
    $region15: #{actor_forward.1} parent=1 // pred_check_branch
      %37 = sbr.rel (0) target = $region17
    $region16: #{actor_forward.1} parent=1 // pred_region
      _
    $region17: #{actor_forward.1} parent=1 // pred_fallthru
      _
    // Predicated region
    $region18: #{actor_forward.1} parent=1 // pred_check
      _
    $region19: #{actor_forward.1} parent=1 // pred_check_branch
      %39 = sbr.rel (0) target = $region21
    $region20: #{actor_forward.1} parent=1 // pred_region
      _
    $region21: #{actor_forward.1} parent=1 // pred_fallthru
      _
    // Predicated region
    $region22: #{actor_forward.1} parent=1 // pred_check
      _
    $region23: #{actor_forward.1} parent=1 // pred_check_branch
      %41 = sbr.rel (0) target = $region25
    $region24: #{actor_forward.1} parent=1 // pred_region
      %42 = dma.done [#allocation3], 128
    $region25: #{actor_forward.1} parent=1 // pred_fallthru
      _
    // Predicated region
    $region26: #{actor_forward.1} parent=1 // pred_check
      _
    $region27: #{actor_forward.1} parent=1 // pred_check_branch
      %44 = sbr.rel (0) target = $region29
    $region28: #{actor_forward.1} parent=1 // pred_region
      %45 = dma.done [#allocation5], 256
    $region29: #{actor_forward.1} parent=1 // pred_fallthru
      _
    %v46 = vld [vmem:[#allocation2] sm:$0xff]
    %v47 = vld [vmem:[%s4] sm:$0x1]
    %v48 = vld [vmem:[%s4 + $0x1] sm:$0x1]
    %v49 = vld [vmem:[%s4 + $0x2] sm:$0x1]
    %v50 = vld [vmem:[%s4 + $0x3] sm:$0x1]
    %v51 = vld [vmem:[#allocation4] sm:$0xff]
    %v52 = vld [vmem:[#allocation4 + $0x8] sm:$0xff]
    %v53 = vlaneseq
    %v54 = vshrl.u32 %v53, 7
    %v55 = vsub.s32 0, %v54
    %v56 = vrot.slane %v47, %v55
    %vm57 = vcmask 130048
    %v59 = vsel %vm57, %v46, 0
    %61 = vmatprep.subr.mxu0 0.0
    %62 = vmatpush1.msra.mxu0 0.0
    %63 = vmatprep.subr.mxu0 0.0
    %64 = vmatpush1.msra.mxu0 0.0
    %65 = vmatprep.subr.mxu0 0.0
    %66 = vmatpush1.msra.mxu0 0.0
    %67 = vmatprep.subr.mxu0 0.0
    %68 = vmatpush1.msra.mxu0 0.0
    %69 = vmatprep.subr.mxu0 0.0
    %70 = vmatpush1.msra.mxu0 0.0
    %71 = vmatprep.subr.mxu0 0.0
    %72 = vmatpush1.msra.mxu0 0.0
    %73 = vmatprep.subr.mxu0 0.0
    %74 = vmatpush1.msra.mxu0 0.0
    %75 = vmatprep.subr.mxu0 0.0
    %76 = vmatpush1.msra.mxu0 0.0
    %77 = vmatprep.subr.mxu0 0.0
    %78 = vmatpush1.msra.mxu0 0.0
    %79 = vmatprep.subr.mxu0 0.0
    %80 = vmatpush1.msra.mxu0 0.0
    %81 = vmatprep.subr.mxu0 0.0
    %82 = vmatpush1.msra.mxu0 0.0
    %83 = vmatprep.subr.mxu0 0.0
    %84 = vmatpush1.msra.mxu0 0.0
    %85 = vmatprep.subr.mxu0 0.0
    %86 = vmatpush1.msra.mxu0 0.0
    %87 = vmatprep.subr.mxu0 0.0
    %88 = vmatpush1.msra.mxu0 0.0
    %89 = vmatprep.subr.mxu0 0.0
    %v90 = vand.u32 %v52, 4294901760
    %91 = vmatpush1.msra.mxu0 %v90
    %92 = vmatprep.subr.mxu0 0.0
    %v93 = vand.u32 %v51, 4294901760
    %94 = vmatpush1.msra.mxu0 %v93
    %95 = vmatprep.subr.mxu0 0.0
    %96 = vmatpush2.msra.mxu0 0.0
    %97 = vmatprep.subr.mxu0 0.0
    %98 = vmatpush2.msra.mxu0 0.0
    %99 = vmatprep.subr.mxu0 0.0
    %100 = vmatpush2.msra.mxu0 0.0
    %101 = vmatprep.subr.mxu0 0.0
    %102 = vmatpush2.msra.mxu0 0.0
    %103 = vmatprep.subr.mxu0 0.0
    %104 = vmatpush2.msra.mxu0 0.0
    %105 = vmatprep.subr.mxu0 0.0
    %106 = vmatpush2.msra.mxu0 0.0
    %107 = vmatprep.subr.mxu0 0.0
    %108 = vmatpush2.msra.mxu0 0.0
    %109 = vmatprep.subr.mxu0 0.0
    %110 = vmatpush2.msra.mxu0 0.0
    %111 = vmatprep.subr.mxu0 0.0
    %112 = vmatpush2.msra.mxu0 0.0
    %113 = vmatprep.subr.mxu0 0.0
    %114 = vmatpush2.msra.mxu0 0.0
    %115 = vmatprep.subr.mxu0 0.0
    %116 = vmatpush2.msra.mxu0 0.0
    %117 = vmatprep.subr.mxu0 0.0
    %118 = vmatpush2.msra.mxu0 0.0
    %119 = vmatprep.subr.mxu0 0.0
    %120 = vmatpush2.msra.mxu0 0.0
    %121 = vmatprep.subr.mxu0 0.0
    %122 = vmatpush2.msra.mxu0 0.0
    %123 = vmatprep.subr.mxu0 0.0
    %124 = vmatpush2.msra.mxu0 0.0
    %125 = vmatprep.subr.mxu0 0.0
    %126 = vmatpush2.msra.mxu0 0.0
    %127 = vmatprep.mubr.f32.mxu0 0.0
    %v128 = vand.u32 %v59, 4294901760
    %v129 = vsub.f32 %v59, %v128
    %v130 = vand.u32 %v129, 4294901760
    %v131 = vsub.f32 %v129, %v130
    %v132 = vand.u32 %v131, 4294901760
    %133 = vmatmul.mubr.f32.gmra.mxu0 %v132
    %v134 = vpop.f32.mrf.mxu0
    %v135 = vadd.f32 %v56, %v134
    %v136 = vpop.f32.mrf.mxu0
    %137 = vdwg.mxu0
    %138 = vmatprep.subr.mxu0 0.0
    %139 = vmatpush1.msra.mxu0 0.0
    %140 = vmatprep.subr.mxu0 0.0
    %141 = vmatpush1.msra.mxu0 0.0
    %142 = vmatprep.subr.mxu0 0.0
    %143 = vmatpush1.msra.mxu0 0.0
    %144 = vmatprep.subr.mxu0 0.0
    %145 = vmatpush1.msra.mxu0 0.0
    %146 = vmatprep.subr.mxu0 0.0
    %147 = vmatpush1.msra.mxu0 0.0
    %148 = vmatprep.subr.mxu0 0.0
    %149 = vmatpush1.msra.mxu0 0.0
    %150 = vmatprep.subr.mxu0 0.0
    %151 = vmatpush1.msra.mxu0 0.0
    %152 = vmatprep.subr.mxu0 0.0
    %153 = vmatpush1.msra.mxu0 0.0
    %154 = vmatprep.subr.mxu0 0.0
    %155 = vmatpush1.msra.mxu0 0.0
    %156 = vmatprep.subr.mxu0 0.0
    %157 = vmatpush1.msra.mxu0 0.0
    %158 = vmatprep.subr.mxu0 0.0
    %159 = vmatpush1.msra.mxu0 0.0
    %160 = vmatprep.subr.mxu0 0.0
    %161 = vmatpush1.msra.mxu0 0.0
    %162 = vmatprep.subr.mxu0 0.0
    %163 = vmatpush1.msra.mxu0 0.0
    %164 = vmatprep.subr.mxu0 0.0
    %165 = vmatpush1.msra.mxu0 0.0
    %166 = vmatprep.subr.mxu0 0.0
    %v167 = vand.u32 %v52, 4294901760
    %v168 = vsub.f32 %v52, %v167
    %v169 = vand.u32 %v168, 4294901760
    %v170 = vsub.f32 %v168, %v169
    %v171 = vand.u32 %v170, 4294901760
    %172 = vmatpush1.msra.mxu0 %v171
    %173 = vmatprep.subr.mxu0 0.0
    %v174 = vand.u32 %v51, 4294901760
    %v175 = vsub.f32 %v51, %v174
    %v176 = vand.u32 %v175, 4294901760
    %v177 = vsub.f32 %v175, %v176
    %v178 = vand.u32 %v177, 4294901760
    %179 = vmatpush1.msra.mxu0 %v178
    %180 = vmatprep.subr.mxu0 0.0
    %181 = vmatpush2.msra.mxu0 0.0
    %182 = vmatprep.subr.mxu0 0.0
    %183 = vmatpush2.msra.mxu0 0.0
    %184 = vmatprep.subr.mxu0 0.0
    %185 = vmatpush2.msra.mxu0 0.0
    %186 = vmatprep.subr.mxu0 0.0
    %187 = vmatpush2.msra.mxu0 0.0
    %188 = vmatprep.subr.mxu0 0.0
    %189 = vmatpush2.msra.mxu0 0.0
    %190 = vmatprep.subr.mxu0 0.0
    %191 = vmatpush2.msra.mxu0 0.0
    %192 = vmatprep.subr.mxu0 0.0
    %193 = vmatpush2.msra.mxu0 0.0
    %194 = vmatprep.subr.mxu0 0.0
    %195 = vmatpush2.msra.mxu0 0.0
    %196 = vmatprep.subr.mxu0 0.0
    %197 = vmatpush2.msra.mxu0 0.0
    %198 = vmatprep.subr.mxu0 0.0
    %199 = vmatpush2.msra.mxu0 0.0
    %200 = vmatprep.subr.mxu0 0.0
    %201 = vmatpush2.msra.mxu0 0.0
    %202 = vmatprep.subr.mxu0 0.0
    %203 = vmatpush2.msra.mxu0 0.0
    %204 = vmatprep.subr.mxu0 0.0
    %205 = vmatpush2.msra.mxu0 0.0
    %206 = vmatprep.subr.mxu0 0.0
    %207 = vmatpush2.msra.mxu0 0.0
    %208 = vmatprep.subr.mxu0 0.0
    %209 = vmatpush2.msra.mxu0 0.0
    %210 = vmatprep.subr.mxu0 0.0
    %211 = vmatpush2.msra.mxu0 0.0
    %212 = vmatprep.mubr.f32.mxu0 0.0
    %v213 = vand.u32 %v59, 4294901760
    %214 = vmatmul.mubr.f32.gmra.mxu0 %v213
    %v215 = vpop.f32.mrf.mxu0
    %v216 = vadd.f32 %v135, %v215
    %v217 = vpop.f32.mrf.mxu0
    %218 = vdwg.mxu0
    %219 = vmatprep.subr.mxu0 0.0
    %220 = vmatpush1.msra.mxu0 0.0
    %221 = vmatprep.subr.mxu0 0.0
    %222 = vmatpush1.msra.mxu0 0.0
    %223 = vmatprep.subr.mxu0 0.0
    %224 = vmatpush1.msra.mxu0 0.0
    %225 = vmatprep.subr.mxu0 0.0
    %226 = vmatpush1.msra.mxu0 0.0
    %227 = vmatprep.subr.mxu0 0.0
    %228 = vmatpush1.msra.mxu0 0.0
    %229 = vmatprep.subr.mxu0 0.0
    %230 = vmatpush1.msra.mxu0 0.0
    %231 = vmatprep.subr.mxu0 0.0
    %232 = vmatpush1.msra.mxu0 0.0
    %233 = vmatprep.subr.mxu0 0.0
    %234 = vmatpush1.msra.mxu0 0.0
    %235 = vmatprep.subr.mxu0 0.0
    %236 = vmatpush1.msra.mxu0 0.0
    %237 = vmatprep.subr.mxu0 0.0
    %238 = vmatpush1.msra.mxu0 0.0
    %239 = vmatprep.subr.mxu0 0.0
    %240 = vmatpush1.msra.mxu0 0.0
    %241 = vmatprep.subr.mxu0 0.0
    %242 = vmatpush1.msra.mxu0 0.0
    %243 = vmatprep.subr.mxu0 0.0
    %244 = vmatpush1.msra.mxu0 0.0
    %245 = vmatprep.subr.mxu0 0.0
    %246 = vmatpush1.msra.mxu0 0.0
    %247 = vmatprep.subr.mxu0 0.0
    %v248 = vand.u32 %v52, 4294901760
    %v249 = vsub.f32 %v52, %v248
    %250 = vmatpush1.msra.mxu0 %v249
    %251 = vmatprep.subr.mxu0 0.0
    %v252 = vand.u32 %v51, 4294901760
    %v253 = vsub.f32 %v51, %v252
    %254 = vmatpush1.msra.mxu0 %v253
    %255 = vmatprep.subr.mxu0 0.0
    %256 = vmatpush2.msra.mxu0 0.0
    %257 = vmatprep.subr.mxu0 0.0
    %258 = vmatpush2.msra.mxu0 0.0
    %259 = vmatprep.subr.mxu0 0.0
    %260 = vmatpush2.msra.mxu0 0.0
    %261 = vmatprep.subr.mxu0 0.0
    %262 = vmatpush2.msra.mxu0 0.0
    %263 = vmatprep.subr.mxu0 0.0
    %264 = vmatpush2.msra.mxu0 0.0
    %265 = vmatprep.subr.mxu0 0.0
    %266 = vmatpush2.msra.mxu0 0.0
    %267 = vmatprep.subr.mxu0 0.0
    %268 = vmatpush2.msra.mxu0 0.0
    %269 = vmatprep.subr.mxu0 0.0
    %270 = vmatpush2.msra.mxu0 0.0
    %271 = vmatprep.subr.mxu0 0.0
    %272 = vmatpush2.msra.mxu0 0.0
    %273 = vmatprep.subr.mxu0 0.0
    %274 = vmatpush2.msra.mxu0 0.0
    %275 = vmatprep.subr.mxu0 0.0
    %276 = vmatpush2.msra.mxu0 0.0
    %277 = vmatprep.subr.mxu0 0.0
    %278 = vmatpush2.msra.mxu0 0.0
    %279 = vmatprep.subr.mxu0 0.0
    %280 = vmatpush2.msra.mxu0 0.0
    %281 = vmatprep.subr.mxu0 0.0
    %282 = vmatpush2.msra.mxu0 0.0
    %283 = vmatprep.subr.mxu0 0.0
    %284 = vmatpush2.msra.mxu0 0.0
    %285 = vmatprep.subr.mxu0 0.0
    %286 = vmatpush2.msra.mxu0 0.0
    %287 = vmatprep.mubr.f32.mxu0 0.0
    %v288 = vand.u32 %v59, 4294901760
    %v289 = vsub.f32 %v59, %v288
    %290 = vmatmul.mubr.f32.gmra.mxu0 %v289
    %v291 = vpop.f32.mrf.mxu0
    %v292 = vadd.f32 %v216, %v291
    %v293 = vpop.f32.mrf.mxu0
    %294 = vdwg.mxu0
    %295 = vmatprep.subr.mxu0 0.0
    %296 = vmatpush1.msra.mxu0 0.0
    %297 = vmatprep.subr.mxu0 0.0
    %298 = vmatpush1.msra.mxu0 0.0
    %299 = vmatprep.subr.mxu0 0.0
    %300 = vmatpush1.msra.mxu0 0.0
    %301 = vmatprep.subr.mxu0 0.0
    %302 = vmatpush1.msra.mxu0 0.0
    %303 = vmatprep.subr.mxu0 0.0
    %304 = vmatpush1.msra.mxu0 0.0
    %305 = vmatprep.subr.mxu0 0.0
    %306 = vmatpush1.msra.mxu0 0.0
    %307 = vmatprep.subr.mxu0 0.0
    %308 = vmatpush1.msra.mxu0 0.0
    %309 = vmatprep.subr.mxu0 0.0
    %310 = vmatpush1.msra.mxu0 0.0
    %311 = vmatprep.subr.mxu0 0.0
    %312 = vmatpush1.msra.mxu0 0.0
    %313 = vmatprep.subr.mxu0 0.0
    %314 = vmatpush1.msra.mxu0 0.0
    %315 = vmatprep.subr.mxu0 0.0
    %316 = vmatpush1.msra.mxu0 0.0
    %317 = vmatprep.subr.mxu0 0.0
    %318 = vmatpush1.msra.mxu0 0.0
    %319 = vmatprep.subr.mxu0 0.0
    %320 = vmatpush1.msra.mxu0 0.0
    %321 = vmatprep.subr.mxu0 0.0
    %322 = vmatpush1.msra.mxu0 0.0
    %323 = vmatprep.subr.mxu0 0.0
    %v324 = vand.u32 %v52, 4294901760
    %325 = vmatpush1.msra.mxu0 %v324
    %326 = vmatprep.subr.mxu0 0.0
    %v327 = vand.u32 %v51, 4294901760
    %328 = vmatpush1.msra.mxu0 %v327
    %329 = vmatprep.subr.mxu0 0.0
    %330 = vmatpush2.msra.mxu0 0.0
    %331 = vmatprep.subr.mxu0 0.0
    %332 = vmatpush2.msra.mxu0 0.0
    %333 = vmatprep.subr.mxu0 0.0
    %334 = vmatpush2.msra.mxu0 0.0
    %335 = vmatprep.subr.mxu0 0.0
    %336 = vmatpush2.msra.mxu0 0.0
    %337 = vmatprep.subr.mxu0 0.0
    %338 = vmatpush2.msra.mxu0 0.0
    %339 = vmatprep.subr.mxu0 0.0
    %340 = vmatpush2.msra.mxu0 0.0
    %341 = vmatprep.subr.mxu0 0.0
    %342 = vmatpush2.msra.mxu0 0.0
    %343 = vmatprep.subr.mxu0 0.0
    %344 = vmatpush2.msra.mxu0 0.0
    %345 = vmatprep.subr.mxu0 0.0
    %346 = vmatpush2.msra.mxu0 0.0
    %347 = vmatprep.subr.mxu0 0.0
    %348 = vmatpush2.msra.mxu0 0.0
    %349 = vmatprep.subr.mxu0 0.0
    %350 = vmatpush2.msra.mxu0 0.0
    %351 = vmatprep.subr.mxu0 0.0
    %352 = vmatpush2.msra.mxu0 0.0
    %353 = vmatprep.subr.mxu0 0.0
    %354 = vmatpush2.msra.mxu0 0.0
    %355 = vmatprep.subr.mxu0 0.0
    %356 = vmatpush2.msra.mxu0 0.0
    %357 = vmatprep.subr.mxu0 0.0
    %358 = vmatpush2.msra.mxu0 0.0
    %359 = vmatprep.subr.mxu0 0.0
    %360 = vmatpush2.msra.mxu0 0.0
    %361 = vmatprep.mubr.f32.mxu0 0.0
    %v362 = vand.u32 %v59, 4294901760
    %v363 = vsub.f32 %v59, %v362
    %v364 = vand.u32 %v363, 4294901760
    %365 = vmatmul.mubr.f32.gmra.mxu0 %v364
    %v366 = vpop.f32.mrf.mxu0
    %v367 = vadd.f32 %v292, %v366
    %v368 = vpop.f32.mrf.mxu0
    %369 = vdwg.mxu0
    %370 = vmatprep.subr.mxu0 0.0
    %371 = vmatpush1.msra.mxu0 0.0
    %372 = vmatprep.subr.mxu0 0.0
    %373 = vmatpush1.msra.mxu0 0.0
    %374 = vmatprep.subr.mxu0 0.0
    %375 = vmatpush1.msra.mxu0 0.0
    %376 = vmatprep.subr.mxu0 0.0
    %377 = vmatpush1.msra.mxu0 0.0
    %378 = vmatprep.subr.mxu0 0.0
    %379 = vmatpush1.msra.mxu0 0.0
    %380 = vmatprep.subr.mxu0 0.0
    %381 = vmatpush1.msra.mxu0 0.0
    %382 = vmatprep.subr.mxu0 0.0
    %383 = vmatpush1.msra.mxu0 0.0
    %384 = vmatprep.subr.mxu0 0.0
    %385 = vmatpush1.msra.mxu0 0.0
    %386 = vmatprep.subr.mxu0 0.0
    %387 = vmatpush1.msra.mxu0 0.0
    %388 = vmatprep.subr.mxu0 0.0
    %389 = vmatpush1.msra.mxu0 0.0
    %390 = vmatprep.subr.mxu0 0.0
    %391 = vmatpush1.msra.mxu0 0.0
    %392 = vmatprep.subr.mxu0 0.0
    %393 = vmatpush1.msra.mxu0 0.0
    %394 = vmatprep.subr.mxu0 0.0
    %395 = vmatpush1.msra.mxu0 0.0
    %396 = vmatprep.subr.mxu0 0.0
    %397 = vmatpush1.msra.mxu0 0.0
    %398 = vmatprep.subr.mxu0 0.0
    %v399 = vand.u32 %v52, 4294901760
    %v400 = vsub.f32 %v52, %v399
    %v401 = vand.u32 %v400, 4294901760
    %402 = vmatpush1.msra.mxu0 %v401
    %403 = vmatprep.subr.mxu0 0.0
    %v404 = vand.u32 %v51, 4294901760
    %v405 = vsub.f32 %v51, %v404
    %v406 = vand.u32 %v405, 4294901760
    %407 = vmatpush1.msra.mxu0 %v406
    %408 = vmatprep.subr.mxu0 0.0
    %409 = vmatpush2.msra.mxu0 0.0
    %410 = vmatprep.subr.mxu0 0.0
    %411 = vmatpush2.msra.mxu0 0.0
    %412 = vmatprep.subr.mxu0 0.0
    %413 = vmatpush2.msra.mxu0 0.0
    %414 = vmatprep.subr.mxu0 0.0
    %415 = vmatpush2.msra.mxu0 0.0
    %416 = vmatprep.subr.mxu0 0.0
    %417 = vmatpush2.msra.mxu0 0.0
    %418 = vmatprep.subr.mxu0 0.0
    %419 = vmatpush2.msra.mxu0 0.0
    %420 = vmatprep.subr.mxu0 0.0
    %421 = vmatpush2.msra.mxu0 0.0
    %422 = vmatprep.subr.mxu0 0.0
    %423 = vmatpush2.msra.mxu0 0.0
    %424 = vmatprep.subr.mxu0 0.0
    %425 = vmatpush2.msra.mxu0 0.0
    %426 = vmatprep.subr.mxu0 0.0
    %427 = vmatpush2.msra.mxu0 0.0
    %428 = vmatprep.subr.mxu0 0.0
    %429 = vmatpush2.msra.mxu0 0.0
    %430 = vmatprep.subr.mxu0 0.0
    %431 = vmatpush2.msra.mxu0 0.0
    %432 = vmatprep.subr.mxu0 0.0
    %433 = vmatpush2.msra.mxu0 0.0
    %434 = vmatprep.subr.mxu0 0.0
    %435 = vmatpush2.msra.mxu0 0.0
    %436 = vmatprep.subr.mxu0 0.0
    %437 = vmatpush2.msra.mxu0 0.0
    %438 = vmatprep.subr.mxu0 0.0
    %439 = vmatpush2.msra.mxu0 0.0
    %440 = vmatprep.mubr.f32.mxu0 0.0
    %v441 = vand.u32 %v59, 4294901760
    %442 = vmatmul.mubr.f32.gmra.mxu0 %v441
    %v443 = vpop.f32.mrf.mxu0
    %v444 = vadd.f32 %v367, %v443
    %v445 = vpop.f32.mrf.mxu0
    %446 = vdwg.mxu0
    %447 = vmatprep.subr.mxu0 0.0
    %448 = vmatpush1.msra.mxu0 0.0
    %449 = vmatprep.subr.mxu0 0.0
    %450 = vmatpush1.msra.mxu0 0.0
    %451 = vmatprep.subr.mxu0 0.0
    %452 = vmatpush1.msra.mxu0 0.0
    %453 = vmatprep.subr.mxu0 0.0
    %454 = vmatpush1.msra.mxu0 0.0
    %455 = vmatprep.subr.mxu0 0.0
    %456 = vmatpush1.msra.mxu0 0.0
    %457 = vmatprep.subr.mxu0 0.0
    %458 = vmatpush1.msra.mxu0 0.0
    %459 = vmatprep.subr.mxu0 0.0
    %460 = vmatpush1.msra.mxu0 0.0
    %461 = vmatprep.subr.mxu0 0.0
    %462 = vmatpush1.msra.mxu0 0.0
    %463 = vmatprep.subr.mxu0 0.0
    %464 = vmatpush1.msra.mxu0 0.0
    %465 = vmatprep.subr.mxu0 0.0
    %466 = vmatpush1.msra.mxu0 0.0
    %467 = vmatprep.subr.mxu0 0.0
    %468 = vmatpush1.msra.mxu0 0.0
    %469 = vmatprep.subr.mxu0 0.0
    %470 = vmatpush1.msra.mxu0 0.0
    %471 = vmatprep.subr.mxu0 0.0
    %472 = vmatpush1.msra.mxu0 0.0
    %473 = vmatprep.subr.mxu0 0.0
    %474 = vmatpush1.msra.mxu0 0.0
    %475 = vmatprep.subr.mxu0 0.0
    %v476 = vand.u32 %v52, 4294901760
    %477 = vmatpush1.msra.mxu0 %v476
    %478 = vmatprep.subr.mxu0 0.0
    %v479 = vand.u32 %v51, 4294901760
    %480 = vmatpush1.msra.mxu0 %v479
    %481 = vmatprep.subr.mxu0 0.0
    %482 = vmatpush2.msra.mxu0 0.0
    %483 = vmatprep.subr.mxu0 0.0
    %484 = vmatpush2.msra.mxu0 0.0
    %485 = vmatprep.subr.mxu0 0.0
    %486 = vmatpush2.msra.mxu0 0.0
    %487 = vmatprep.subr.mxu0 0.0
    %488 = vmatpush2.msra.mxu0 0.0
    %489 = vmatprep.subr.mxu0 0.0
    %490 = vmatpush2.msra.mxu0 0.0
    %491 = vmatprep.subr.mxu0 0.0
    %492 = vmatpush2.msra.mxu0 0.0
    %493 = vmatprep.subr.mxu0 0.0
    %494 = vmatpush2.msra.mxu0 0.0
    %495 = vmatprep.subr.mxu0 0.0
    %496 = vmatpush2.msra.mxu0 0.0
    %497 = vmatprep.subr.mxu0 0.0
    %498 = vmatpush2.msra.mxu0 0.0
    %499 = vmatprep.subr.mxu0 0.0
    %500 = vmatpush2.msra.mxu0 0.0
    %501 = vmatprep.subr.mxu0 0.0
    %502 = vmatpush2.msra.mxu0 0.0
    %503 = vmatprep.subr.mxu0 0.0
    %504 = vmatpush2.msra.mxu0 0.0
    %505 = vmatprep.subr.mxu0 0.0
    %506 = vmatpush2.msra.mxu0 0.0
    %507 = vmatprep.subr.mxu0 0.0
    %508 = vmatpush2.msra.mxu0 0.0
    %509 = vmatprep.subr.mxu0 0.0
    %510 = vmatpush2.msra.mxu0 0.0
    %511 = vmatprep.subr.mxu0 0.0
    %512 = vmatpush2.msra.mxu0 0.0
    %513 = vmatprep.mubr.f32.mxu0 0.0
    %v514 = vand.u32 %v59, 4294901760
    %515 = vmatmul.mubr.f32.gmra.mxu0 %v514
    %v516 = vpop.f32.mrf.mxu0
    %v517 = vadd.f32 %v444, %v516
    %v518 = vpop.f32.mrf.mxu0
    %519 = vdwg.mxu0
    %v520 = vmax.f32 %v517, 0.0
    %v521 = vld [vmem:[%s2] sm:$0xff]
    %v522 = vld [vmem:[%s2 + $0x8] sm:$0xff]
    %v523 = vld [vmem:[%s2 + $0x10] sm:$0xff]
    %v524 = vld [vmem:[%s2 + $0x18] sm:$0xff]
    %v525 = vld [vmem:[%s2 + $0x20] sm:$0xff]
    %v526 = vld [vmem:[%s2 + $0x28] sm:$0xff]
    %v527 = vld [vmem:[%s2 + $0x30] sm:$0xff]
    %v528 = vld [vmem:[%s2 + $0x38] sm:$0xff]
    %v529 = vld [vmem:[%s2 + $0x40] sm:$0xff]
    %v530 = vld [vmem:[%s2 + $0x48] sm:$0xff]
    %v531 = vld [vmem:[%s2 + $0x50] sm:$0xff]
    %v532 = vld [vmem:[%s2 + $0x58] sm:$0xff]
    %v533 = vld [vmem:[%s2 + $0x60] sm:$0xff]
    %v534 = vld [vmem:[%s2 + $0x68] sm:$0xff]
    %v535 = vld [vmem:[%s2 + $0x70] sm:$0xff]
    %v536 = vld [vmem:[%s2 + $0x78] sm:$0xff]
    %v537 = vlaneseq
    %v538 = vshrl.u32 %v537, 7
    %v539 = vsub.s32 0, %v538
    %v540 = vrot.slane %v48, %v539
    %541 = vmatprep.subr.mxu0 0.0
    %v542 = vand.u32 %v536, 4294901760
    %543 = vmatpush1.msra.mxu0 %v542
    %544 = vmatprep.subr.mxu0 0.0
    %v545 = vand.u32 %v535, 4294901760
    %546 = vmatpush1.msra.mxu0 %v545
    %547 = vmatprep.subr.mxu0 0.0
    %v548 = vand.u32 %v534, 4294901760
    %549 = vmatpush1.msra.mxu0 %v548
    %550 = vmatprep.subr.mxu0 0.0
    %v551 = vand.u32 %v533, 4294901760
    %552 = vmatpush1.msra.mxu0 %v551
    %553 = vmatprep.subr.mxu0 0.0
    %v554 = vand.u32 %v532, 4294901760
    %555 = vmatpush1.msra.mxu0 %v554
    %556 = vmatprep.subr.mxu0 0.0
    %v557 = vand.u32 %v531, 4294901760
    %558 = vmatpush1.msra.mxu0 %v557
    %559 = vmatprep.subr.mxu0 0.0
    %v560 = vand.u32 %v530, 4294901760
    %561 = vmatpush1.msra.mxu0 %v560
    %562 = vmatprep.subr.mxu0 0.0
    %v563 = vand.u32 %v529, 4294901760
    %564 = vmatpush1.msra.mxu0 %v563
    %565 = vmatprep.subr.mxu0 0.0
    %v566 = vand.u32 %v528, 4294901760
    %567 = vmatpush1.msra.mxu0 %v566
    %568 = vmatprep.subr.mxu0 0.0
    %v569 = vand.u32 %v527, 4294901760
    %570 = vmatpush1.msra.mxu0 %v569
    %571 = vmatprep.subr.mxu0 0.0
    %v572 = vand.u32 %v526, 4294901760
    %573 = vmatpush1.msra.mxu0 %v572
    %574 = vmatprep.subr.mxu0 0.0
    %v575 = vand.u32 %v525, 4294901760
    %576 = vmatpush1.msra.mxu0 %v575
    %577 = vmatprep.subr.mxu0 0.0
    %v578 = vand.u32 %v524, 4294901760
    %579 = vmatpush1.msra.mxu0 %v578
    %580 = vmatprep.subr.mxu0 0.0
    %v581 = vand.u32 %v523, 4294901760
    %582 = vmatpush1.msra.mxu0 %v581
    %583 = vmatprep.subr.mxu0 0.0
    %v584 = vand.u32 %v522, 4294901760
    %585 = vmatpush1.msra.mxu0 %v584
    %586 = vmatprep.subr.mxu0 0.0
    %v587 = vand.u32 %v521, 4294901760
    %588 = vmatpush1.msra.mxu0 %v587
    %589 = vmatprep.subr.mxu0 0.0
    %590 = vmatpush2.msra.mxu0 0.0
    %591 = vmatprep.subr.mxu0 0.0
    %592 = vmatpush2.msra.mxu0 0.0
    %593 = vmatprep.subr.mxu0 0.0
    %594 = vmatpush2.msra.mxu0 0.0
    %595 = vmatprep.subr.mxu0 0.0
    %596 = vmatpush2.msra.mxu0 0.0
    %597 = vmatprep.subr.mxu0 0.0
    %598 = vmatpush2.msra.mxu0 0.0
    %599 = vmatprep.subr.mxu0 0.0
    %600 = vmatpush2.msra.mxu0 0.0
    %601 = vmatprep.subr.mxu0 0.0
    %602 = vmatpush2.msra.mxu0 0.0
    %603 = vmatprep.subr.mxu0 0.0
    %604 = vmatpush2.msra.mxu0 0.0
    %605 = vmatprep.subr.mxu0 0.0
    %606 = vmatpush2.msra.mxu0 0.0
    %607 = vmatprep.subr.mxu0 0.0
    %608 = vmatpush2.msra.mxu0 0.0
    %609 = vmatprep.subr.mxu0 0.0
    %610 = vmatpush2.msra.mxu0 0.0
    %611 = vmatprep.subr.mxu0 0.0
    %612 = vmatpush2.msra.mxu0 0.0
    %613 = vmatprep.subr.mxu0 0.0
    %614 = vmatpush2.msra.mxu0 0.0
    %615 = vmatprep.subr.mxu0 0.0
    %616 = vmatpush2.msra.mxu0 0.0
    %617 = vmatprep.subr.mxu0 0.0
    %618 = vmatpush2.msra.mxu0 0.0
    %619 = vmatprep.subr.mxu0 0.0
    %620 = vmatpush2.msra.mxu0 0.0
    %621 = vmatprep.mubr.f32.mxu0 0.0
    %v622 = vand.u32 %v520, 4294901760
    %v623 = vsub.f32 %v520, %v622
    %v624 = vand.u32 %v623, 4294901760
    %v625 = vsub.f32 %v623, %v624
    %v626 = vand.u32 %v625, 4294901760
    %627 = vmatmul.mubr.f32.gmra.mxu0 %v626
    %v628 = vpop.f32.mrf.mxu0
    %v629 = vadd.f32 %v540, %v628
    %v630 = vpop.f32.mrf.mxu0
    %631 = vdwg.mxu0
    %632 = vmatprep.subr.mxu0 0.0
    %v633 = vand.u32 %v536, 4294901760
    %v634 = vsub.f32 %v536, %v633
    %v635 = vand.u32 %v634, 4294901760
    %v636 = vsub.f32 %v634, %v635
    %v637 = vand.u32 %v636, 4294901760
    %638 = vmatpush1.msra.mxu0 %v637
    %639 = vmatprep.subr.mxu0 0.0
    %v640 = vand.u32 %v535, 4294901760
    %v641 = vsub.f32 %v535, %v640
    %v642 = vand.u32 %v641, 4294901760
    %v643 = vsub.f32 %v641, %v642
    %v644 = vand.u32 %v643, 4294901760
    %645 = vmatpush1.msra.mxu0 %v644
    %646 = vmatprep.subr.mxu0 0.0
    %v647 = vand.u32 %v534, 4294901760
    %v648 = vsub.f32 %v534, %v647
    %v649 = vand.u32 %v648, 4294901760
    %v650 = vsub.f32 %v648, %v649
    %v651 = vand.u32 %v650, 4294901760
    %652 = vmatpush1.msra.mxu0 %v651
    %653 = vmatprep.subr.mxu0 0.0
    %v654 = vand.u32 %v533, 4294901760
    %v655 = vsub.f32 %v533, %v654
    %v656 = vand.u32 %v655, 4294901760
    %v657 = vsub.f32 %v655, %v656
    %v658 = vand.u32 %v657, 4294901760
    %659 = vmatpush1.msra.mxu0 %v658
    %660 = vmatprep.subr.mxu0 0.0
    %v661 = vand.u32 %v532, 4294901760
    %v662 = vsub.f32 %v532, %v661
    %v663 = vand.u32 %v662, 4294901760
    %v664 = vsub.f32 %v662, %v663
    %v665 = vand.u32 %v664, 4294901760
    %666 = vmatpush1.msra.mxu0 %v665
    %667 = vmatprep.subr.mxu0 0.0
    %v668 = vand.u32 %v531, 4294901760
    %v669 = vsub.f32 %v531, %v668
    %v670 = vand.u32 %v669, 4294901760
    %v671 = vsub.f32 %v669, %v670
    %v672 = vand.u32 %v671, 4294901760
    %673 = vmatpush1.msra.mxu0 %v672
    %674 = vmatprep.subr.mxu0 0.0
    %v675 = vand.u32 %v530, 4294901760
    %v676 = vsub.f32 %v530, %v675
    %v677 = vand.u32 %v676, 4294901760
    %v678 = vsub.f32 %v676, %v677
    %v679 = vand.u32 %v678, 4294901760
    %680 = vmatpush1.msra.mxu0 %v679
    %681 = vmatprep.subr.mxu0 0.0
    %v682 = vand.u32 %v529, 4294901760
    %v683 = vsub.f32 %v529, %v682
    %v684 = vand.u32 %v683, 4294901760
    %v685 = vsub.f32 %v683, %v684
    %v686 = vand.u32 %v685, 4294901760
    %687 = vmatpush1.msra.mxu0 %v686
    %688 = vmatprep.subr.mxu0 0.0
    %v689 = vand.u32 %v528, 4294901760
    %v690 = vsub.f32 %v528, %v689
    %v691 = vand.u32 %v690, 4294901760
    %v692 = vsub.f32 %v690, %v691
    %v693 = vand.u32 %v692, 4294901760
    %694 = vmatpush1.msra.mxu0 %v693
    %695 = vmatprep.subr.mxu0 0.0
    %v696 = vand.u32 %v527, 4294901760
    %v697 = vsub.f32 %v527, %v696
    %v698 = vand.u32 %v697, 4294901760
    %v699 = vsub.f32 %v697, %v698
    %v700 = vand.u32 %v699, 4294901760
    %701 = vmatpush1.msra.mxu0 %v700
    %702 = vmatprep.subr.mxu0 0.0
    %v703 = vand.u32 %v526, 4294901760
    %v704 = vsub.f32 %v526, %v703
    %v705 = vand.u32 %v704, 4294901760
    %v706 = vsub.f32 %v704, %v705
    %v707 = vand.u32 %v706, 4294901760
    %708 = vmatpush1.msra.mxu0 %v707
    %709 = vmatprep.subr.mxu0 0.0
    %v710 = vand.u32 %v525, 4294901760
    %v711 = vsub.f32 %v525, %v710
    %v712 = vand.u32 %v711, 4294901760
    %v713 = vsub.f32 %v711, %v712
    %v714 = vand.u32 %v713, 4294901760
    %715 = vmatpush1.msra.mxu0 %v714
    %716 = vmatprep.subr.mxu0 0.0
    %v717 = vand.u32 %v524, 4294901760
    %v718 = vsub.f32 %v524, %v717
    %v719 = vand.u32 %v718, 4294901760
    %v720 = vsub.f32 %v718, %v719
    %v721 = vand.u32 %v720, 4294901760
    %722 = vmatpush1.msra.mxu0 %v721
    %723 = vmatprep.subr.mxu0 0.0
    %v724 = vand.u32 %v523, 4294901760
    %v725 = vsub.f32 %v523, %v724
    %v726 = vand.u32 %v725, 4294901760
    %v727 = vsub.f32 %v725, %v726
    %v728 = vand.u32 %v727, 4294901760
    %729 = vmatpush1.msra.mxu0 %v728
    %730 = vmatprep.subr.mxu0 0.0
    %v731 = vand.u32 %v522, 4294901760
    %v732 = vsub.f32 %v522, %v731
    %v733 = vand.u32 %v732, 4294901760
    %v734 = vsub.f32 %v732, %v733
    %v735 = vand.u32 %v734, 4294901760
    %736 = vmatpush1.msra.mxu0 %v735
    %737 = vmatprep.subr.mxu0 0.0
    %v738 = vand.u32 %v521, 4294901760
    %v739 = vsub.f32 %v521, %v738
    %v740 = vand.u32 %v739, 4294901760
    %v741 = vsub.f32 %v739, %v740
    %v742 = vand.u32 %v741, 4294901760
    %743 = vmatpush1.msra.mxu0 %v742
    %744 = vmatprep.subr.mxu0 0.0
    %745 = vmatpush2.msra.mxu0 0.0
    %746 = vmatprep.subr.mxu0 0.0
    %747 = vmatpush2.msra.mxu0 0.0
    %748 = vmatprep.subr.mxu0 0.0
    %749 = vmatpush2.msra.mxu0 0.0
    %750 = vmatprep.subr.mxu0 0.0
    %751 = vmatpush2.msra.mxu0 0.0
    %752 = vmatprep.subr.mxu0 0.0
    %753 = vmatpush2.msra.mxu0 0.0
    %754 = vmatprep.subr.mxu0 0.0
    %755 = vmatpush2.msra.mxu0 0.0
    %756 = vmatprep.subr.mxu0 0.0
    %757 = vmatpush2.msra.mxu0 0.0
    %758 = vmatprep.subr.mxu0 0.0
    %759 = vmatpush2.msra.mxu0 0.0
    %760 = vmatprep.subr.mxu0 0.0
    %761 = vmatpush2.msra.mxu0 0.0
    %762 = vmatprep.subr.mxu0 0.0
    %763 = vmatpush2.msra.mxu0 0.0
    %764 = vmatprep.subr.mxu0 0.0
    %765 = vmatpush2.msra.mxu0 0.0
    %766 = vmatprep.subr.mxu0 0.0
    %767 = vmatpush2.msra.mxu0 0.0
    %768 = vmatprep.subr.mxu0 0.0
    %769 = vmatpush2.msra.mxu0 0.0
    %770 = vmatprep.subr.mxu0 0.0
    %771 = vmatpush2.msra.mxu0 0.0
    %772 = vmatprep.subr.mxu0 0.0
    %773 = vmatpush2.msra.mxu0 0.0
    %774 = vmatprep.subr.mxu0 0.0
    %775 = vmatpush2.msra.mxu0 0.0
    %776 = vmatprep.mubr.f32.mxu0 0.0
    %v777 = vand.u32 %v520, 4294901760
    %778 = vmatmul.mubr.f32.gmra.mxu0 %v777
    %v779 = vpop.f32.mrf.mxu0
    %v780 = vadd.f32 %v629, %v779
    %v781 = vpop.f32.mrf.mxu0
    %782 = vdwg.mxu0
    %783 = vmatprep.subr.mxu0 0.0
    %v784 = vand.u32 %v536, 4294901760
    %v785 = vsub.f32 %v536, %v784
    %786 = vmatpush1.msra.mxu0 %v785
    %787 = vmatprep.subr.mxu0 0.0
    %v788 = vand.u32 %v535, 4294901760
    %v789 = vsub.f32 %v535, %v788
    %790 = vmatpush1.msra.mxu0 %v789
    %791 = vmatprep.subr.mxu0 0.0
    %v792 = vand.u32 %v534, 4294901760
    %v793 = vsub.f32 %v534, %v792
    %794 = vmatpush1.msra.mxu0 %v793
    %795 = vmatprep.subr.mxu0 0.0
    %v796 = vand.u32 %v533, 4294901760
    %v797 = vsub.f32 %v533, %v796
    %798 = vmatpush1.msra.mxu0 %v797
    %799 = vmatprep.subr.mxu0 0.0
    %v800 = vand.u32 %v532, 4294901760
    %v801 = vsub.f32 %v532, %v800
    %802 = vmatpush1.msra.mxu0 %v801
    %803 = vmatprep.subr.mxu0 0.0
    %v804 = vand.u32 %v531, 4294901760
    %v805 = vsub.f32 %v531, %v804
    %806 = vmatpush1.msra.mxu0 %v805
    %807 = vmatprep.subr.mxu0 0.0
    %v808 = vand.u32 %v530, 4294901760
    %v809 = vsub.f32 %v530, %v808
    %810 = vmatpush1.msra.mxu0 %v809
    %811 = vmatprep.subr.mxu0 0.0
    %v812 = vand.u32 %v529, 4294901760
    %v813 = vsub.f32 %v529, %v812
    %814 = vmatpush1.msra.mxu0 %v813
    %815 = vmatprep.subr.mxu0 0.0
    %v816 = vand.u32 %v528, 4294901760
    %v817 = vsub.f32 %v528, %v816
    %818 = vmatpush1.msra.mxu0 %v817
    %819 = vmatprep.subr.mxu0 0.0
    %v820 = vand.u32 %v527, 4294901760
    %v821 = vsub.f32 %v527, %v820
    %822 = vmatpush1.msra.mxu0 %v821
    %823 = vmatprep.subr.mxu0 0.0
    %v824 = vand.u32 %v526, 4294901760
    %v825 = vsub.f32 %v526, %v824
    %826 = vmatpush1.msra.mxu0 %v825
    %827 = vmatprep.subr.mxu0 0.0
    %v828 = vand.u32 %v525, 4294901760
    %v829 = vsub.f32 %v525, %v828
    %830 = vmatpush1.msra.mxu0 %v829
    %831 = vmatprep.subr.mxu0 0.0
    %v832 = vand.u32 %v524, 4294901760
    %v833 = vsub.f32 %v524, %v832
    %834 = vmatpush1.msra.mxu0 %v833
    %835 = vmatprep.subr.mxu0 0.0
    %v836 = vand.u32 %v523, 4294901760
    %v837 = vsub.f32 %v523, %v836
    %838 = vmatpush1.msra.mxu0 %v837
    %839 = vmatprep.subr.mxu0 0.0
    %v840 = vand.u32 %v522, 4294901760
    %v841 = vsub.f32 %v522, %v840
    %842 = vmatpush1.msra.mxu0 %v841
    %843 = vmatprep.subr.mxu0 0.0
    %v844 = vand.u32 %v521, 4294901760
    %v845 = vsub.f32 %v521, %v844
    %846 = vmatpush1.msra.mxu0 %v845
    %847 = vmatprep.subr.mxu0 0.0
    %848 = vmatpush2.msra.mxu0 0.0
    %849 = vmatprep.subr.mxu0 0.0
    %850 = vmatpush2.msra.mxu0 0.0
    %851 = vmatprep.subr.mxu0 0.0
    %852 = vmatpush2.msra.mxu0 0.0
    %853 = vmatprep.subr.mxu0 0.0
    %854 = vmatpush2.msra.mxu0 0.0
    %855 = vmatprep.subr.mxu0 0.0
    %856 = vmatpush2.msra.mxu0 0.0
    %857 = vmatprep.subr.mxu0 0.0
    %858 = vmatpush2.msra.mxu0 0.0
    %859 = vmatprep.subr.mxu0 0.0
    %860 = vmatpush2.msra.mxu0 0.0
    %861 = vmatprep.subr.mxu0 0.0
    %862 = vmatpush2.msra.mxu0 0.0
    %863 = vmatprep.subr.mxu0 0.0
    %864 = vmatpush2.msra.mxu0 0.0
    %865 = vmatprep.subr.mxu0 0.0
    %866 = vmatpush2.msra.mxu0 0.0
    %867 = vmatprep.subr.mxu0 0.0
    %868 = vmatpush2.msra.mxu0 0.0
    %869 = vmatprep.subr.mxu0 0.0
    %870 = vmatpush2.msra.mxu0 0.0
    %871 = vmatprep.subr.mxu0 0.0
    %872 = vmatpush2.msra.mxu0 0.0
    %873 = vmatprep.subr.mxu0 0.0
    %874 = vmatpush2.msra.mxu0 0.0
    %875 = vmatprep.subr.mxu0 0.0
    %876 = vmatpush2.msra.mxu0 0.0
    %877 = vmatprep.subr.mxu0 0.0
    %878 = vmatpush2.msra.mxu0 0.0
    %879 = vmatprep.mubr.f32.mxu0 0.0
    %v880 = vand.u32 %v520, 4294901760
    %v881 = vsub.f32 %v520, %v880
    %882 = vmatmul.mubr.f32.gmra.mxu0 %v881
    %v883 = vpop.f32.mrf.mxu0
    %v884 = vadd.f32 %v780, %v883
    %v885 = vpop.f32.mrf.mxu0
    %886 = vdwg.mxu0
    %887 = vmatprep.subr.mxu0 0.0
    %v888 = vand.u32 %v536, 4294901760
    %889 = vmatpush1.msra.mxu0 %v888
    %890 = vmatprep.subr.mxu0 0.0
    %v891 = vand.u32 %v535, 4294901760
    %892 = vmatpush1.msra.mxu0 %v891
    %893 = vmatprep.subr.mxu0 0.0
    %v894 = vand.u32 %v534, 4294901760
    %895 = vmatpush1.msra.mxu0 %v894
    %896 = vmatprep.subr.mxu0 0.0
    %v897 = vand.u32 %v533, 4294901760
    %898 = vmatpush1.msra.mxu0 %v897
    %899 = vmatprep.subr.mxu0 0.0
    %v900 = vand.u32 %v532, 4294901760
    %901 = vmatpush1.msra.mxu0 %v900
    %902 = vmatprep.subr.mxu0 0.0
    %v903 = vand.u32 %v531, 4294901760
    %904 = vmatpush1.msra.mxu0 %v903
    %905 = vmatprep.subr.mxu0 0.0
    %v906 = vand.u32 %v530, 4294901760
    %907 = vmatpush1.msra.mxu0 %v906
    %908 = vmatprep.subr.mxu0 0.0
    %v909 = vand.u32 %v529, 4294901760
    %910 = vmatpush1.msra.mxu0 %v909
    %911 = vmatprep.subr.mxu0 0.0
    %v912 = vand.u32 %v528, 4294901760
    %913 = vmatpush1.msra.mxu0 %v912
    %914 = vmatprep.subr.mxu0 0.0
    %v915 = vand.u32 %v527, 4294901760
    %916 = vmatpush1.msra.mxu0 %v915
    %917 = vmatprep.subr.mxu0 0.0
    %v918 = vand.u32 %v526, 4294901760
    %919 = vmatpush1.msra.mxu0 %v918
    %920 = vmatprep.subr.mxu0 0.0
    %v921 = vand.u32 %v525, 4294901760
    %922 = vmatpush1.msra.mxu0 %v921
    %923 = vmatprep.subr.mxu0 0.0
    %v924 = vand.u32 %v524, 4294901760
    %925 = vmatpush1.msra.mxu0 %v924
    %926 = vmatprep.subr.mxu0 0.0
    %v927 = vand.u32 %v523, 4294901760
    %928 = vmatpush1.msra.mxu0 %v927
    %929 = vmatprep.subr.mxu0 0.0
    %v930 = vand.u32 %v522, 4294901760
    %931 = vmatpush1.msra.mxu0 %v930
    %932 = vmatprep.subr.mxu0 0.0
    %v933 = vand.u32 %v521, 4294901760
    %934 = vmatpush1.msra.mxu0 %v933
    %935 = vmatprep.subr.mxu0 0.0
    %936 = vmatpush2.msra.mxu0 0.0
    %937 = vmatprep.subr.mxu0 0.0
    %938 = vmatpush2.msra.mxu0 0.0
    %939 = vmatprep.subr.mxu0 0.0
    %940 = vmatpush2.msra.mxu0 0.0
    %941 = vmatprep.subr.mxu0 0.0
    %942 = vmatpush2.msra.mxu0 0.0
    %943 = vmatprep.subr.mxu0 0.0
    %944 = vmatpush2.msra.mxu0 0.0
    %945 = vmatprep.subr.mxu0 0.0
    %946 = vmatpush2.msra.mxu0 0.0
    %947 = vmatprep.subr.mxu0 0.0
    %948 = vmatpush2.msra.mxu0 0.0
    %949 = vmatprep.subr.mxu0 0.0
    %950 = vmatpush2.msra.mxu0 0.0
    %951 = vmatprep.subr.mxu0 0.0
    %952 = vmatpush2.msra.mxu0 0.0
    %953 = vmatprep.subr.mxu0 0.0
    %954 = vmatpush2.msra.mxu0 0.0
    %955 = vmatprep.subr.mxu0 0.0
    %956 = vmatpush2.msra.mxu0 0.0
    %957 = vmatprep.subr.mxu0 0.0
    %958 = vmatpush2.msra.mxu0 0.0
    %959 = vmatprep.subr.mxu0 0.0
    %960 = vmatpush2.msra.mxu0 0.0
    %961 = vmatprep.subr.mxu0 0.0
    %962 = vmatpush2.msra.mxu0 0.0
    %963 = vmatprep.subr.mxu0 0.0
    %964 = vmatpush2.msra.mxu0 0.0
    %965 = vmatprep.subr.mxu0 0.0
    %966 = vmatpush2.msra.mxu0 0.0
    %967 = vmatprep.mubr.f32.mxu0 0.0
    %v968 = vand.u32 %v520, 4294901760
    %v969 = vsub.f32 %v520, %v968
    %v970 = vand.u32 %v969, 4294901760
    %971 = vmatmul.mubr.f32.gmra.mxu0 %v970
    %v972 = vpop.f32.mrf.mxu0
    %v973 = vadd.f32 %v884, %v972
    %v974 = vpop.f32.mrf.mxu0
    %975 = vdwg.mxu0
    %976 = vmatprep.subr.mxu0 0.0
    %v977 = vand.u32 %v536, 4294901760
    %v978 = vsub.f32 %v536, %v977
    %v979 = vand.u32 %v978, 4294901760
    %980 = vmatpush1.msra.mxu0 %v979
    %981 = vmatprep.subr.mxu0 0.0
    %v982 = vand.u32 %v535, 4294901760
    %v983 = vsub.f32 %v535, %v982
    %v984 = vand.u32 %v983, 4294901760
    %985 = vmatpush1.msra.mxu0 %v984
    %986 = vmatprep.subr.mxu0 0.0
    %v987 = vand.u32 %v534, 4294901760
    %v988 = vsub.f32 %v534, %v987
    %v989 = vand.u32 %v988, 4294901760
    %990 = vmatpush1.msra.mxu0 %v989
    %991 = vmatprep.subr.mxu0 0.0
    %v992 = vand.u32 %v533, 4294901760
    %v993 = vsub.f32 %v533, %v992
    %v994 = vand.u32 %v993, 4294901760
    %995 = vmatpush1.msra.mxu0 %v994
    %996 = vmatprep.subr.mxu0 0.0
    %v997 = vand.u32 %v532, 4294901760
    %v998 = vsub.f32 %v532, %v997
    %v999 = vand.u32 %v998, 4294901760
    %1000 = vmatpush1.msra.mxu0 %v999
    %1001 = vmatprep.subr.mxu0 0.0
    %v1002 = vand.u32 %v531, 4294901760
    %v1003 = vsub.f32 %v531, %v1002
    %v1004 = vand.u32 %v1003, 4294901760
    %1005 = vmatpush1.msra.mxu0 %v1004
    %1006 = vmatprep.subr.mxu0 0.0
    %v1007 = vand.u32 %v530, 4294901760
    %v1008 = vsub.f32 %v530, %v1007
    %v1009 = vand.u32 %v1008, 4294901760
    %1010 = vmatpush1.msra.mxu0 %v1009
    %1011 = vmatprep.subr.mxu0 0.0
    %v1012 = vand.u32 %v529, 4294901760
    %v1013 = vsub.f32 %v529, %v1012
    %v1014 = vand.u32 %v1013, 4294901760
    %1015 = vmatpush1.msra.mxu0 %v1014
    %1016 = vmatprep.subr.mxu0 0.0
    %v1017 = vand.u32 %v528, 4294901760
    %v1018 = vsub.f32 %v528, %v1017
    %v1019 = vand.u32 %v1018, 4294901760
    %1020 = vmatpush1.msra.mxu0 %v1019
    %1021 = vmatprep.subr.mxu0 0.0
    %v1022 = vand.u32 %v527, 4294901760
    %v1023 = vsub.f32 %v527, %v1022
    %v1024 = vand.u32 %v1023, 4294901760
    %1025 = vmatpush1.msra.mxu0 %v1024
    %1026 = vmatprep.subr.mxu0 0.0
    %v1027 = vand.u32 %v526, 4294901760
    %v1028 = vsub.f32 %v526, %v1027
    %v1029 = vand.u32 %v1028, 4294901760
    %1030 = vmatpush1.msra.mxu0 %v1029
    %1031 = vmatprep.subr.mxu0 0.0
    %v1032 = vand.u32 %v525, 4294901760
    %v1033 = vsub.f32 %v525, %v1032
    %v1034 = vand.u32 %v1033, 4294901760
    %1035 = vmatpush1.msra.mxu0 %v1034
    %1036 = vmatprep.subr.mxu0 0.0
    %v1037 = vand.u32 %v524, 4294901760
    %v1038 = vsub.f32 %v524, %v1037
    %v1039 = vand.u32 %v1038, 4294901760
    %1040 = vmatpush1.msra.mxu0 %v1039
    %1041 = vmatprep.subr.mxu0 0.0
    %v1042 = vand.u32 %v523, 4294901760
    %v1043 = vsub.f32 %v523, %v1042
    %v1044 = vand.u32 %v1043, 4294901760
    %1045 = vmatpush1.msra.mxu0 %v1044
    %1046 = vmatprep.subr.mxu0 0.0
    %v1047 = vand.u32 %v522, 4294901760
    %v1048 = vsub.f32 %v522, %v1047
    %v1049 = vand.u32 %v1048, 4294901760
    %1050 = vmatpush1.msra.mxu0 %v1049
    %1051 = vmatprep.subr.mxu0 0.0
    %v1052 = vand.u32 %v521, 4294901760
    %v1053 = vsub.f32 %v521, %v1052
    %v1054 = vand.u32 %v1053, 4294901760
    %1055 = vmatpush1.msra.mxu0 %v1054
    %1056 = vmatprep.subr.mxu0 0.0
    %1057 = vmatpush2.msra.mxu0 0.0
    %1058 = vmatprep.subr.mxu0 0.0
    %1059 = vmatpush2.msra.mxu0 0.0
    %1060 = vmatprep.subr.mxu0 0.0
    %1061 = vmatpush2.msra.mxu0 0.0
    %1062 = vmatprep.subr.mxu0 0.0
    %1063 = vmatpush2.msra.mxu0 0.0
    %1064 = vmatprep.subr.mxu0 0.0
    %1065 = vmatpush2.msra.mxu0 0.0
    %1066 = vmatprep.subr.mxu0 0.0
    %1067 = vmatpush2.msra.mxu0 0.0
    %1068 = vmatprep.subr.mxu0 0.0
    %1069 = vmatpush2.msra.mxu0 0.0
    %1070 = vmatprep.subr.mxu0 0.0
    %1071 = vmatpush2.msra.mxu0 0.0
    %1072 = vmatprep.subr.mxu0 0.0
    %1073 = vmatpush2.msra.mxu0 0.0
    %1074 = vmatprep.subr.mxu0 0.0
    %1075 = vmatpush2.msra.mxu0 0.0
    %1076 = vmatprep.subr.mxu0 0.0
    %1077 = vmatpush2.msra.mxu0 0.0
    %1078 = vmatprep.subr.mxu0 0.0
    %1079 = vmatpush2.msra.mxu0 0.0
    %1080 = vmatprep.subr.mxu0 0.0
    %1081 = vmatpush2.msra.mxu0 0.0
    %1082 = vmatprep.subr.mxu0 0.0
    %1083 = vmatpush2.msra.mxu0 0.0
    %1084 = vmatprep.subr.mxu0 0.0
    %1085 = vmatpush2.msra.mxu0 0.0
    %1086 = vmatprep.subr.mxu0 0.0
    %1087 = vmatpush2.msra.mxu0 0.0
    %1088 = vmatprep.mubr.f32.mxu0 0.0
    %v1089 = vand.u32 %v520, 4294901760
    %1090 = vmatmul.mubr.f32.gmra.mxu0 %v1089
    %v1091 = vpop.f32.mrf.mxu0
    %v1092 = vadd.f32 %v973, %v1091
    %v1093 = vpop.f32.mrf.mxu0
    %1094 = vdwg.mxu0
    %1095 = vmatprep.subr.mxu0 0.0
    %v1096 = vand.u32 %v536, 4294901760
    %1097 = vmatpush1.msra.mxu0 %v1096
    %1098 = vmatprep.subr.mxu0 0.0
    %v1099 = vand.u32 %v535, 4294901760
    %1100 = vmatpush1.msra.mxu0 %v1099
    %1101 = vmatprep.subr.mxu0 0.0
    %v1102 = vand.u32 %v534, 4294901760
    %1103 = vmatpush1.msra.mxu0 %v1102
    %1104 = vmatprep.subr.mxu0 0.0
    %v1105 = vand.u32 %v533, 4294901760
    %1106 = vmatpush1.msra.mxu0 %v1105
    %1107 = vmatprep.subr.mxu0 0.0
    %v1108 = vand.u32 %v532, 4294901760
    %1109 = vmatpush1.msra.mxu0 %v1108
    %1110 = vmatprep.subr.mxu0 0.0
    %v1111 = vand.u32 %v531, 4294901760
    %1112 = vmatpush1.msra.mxu0 %v1111
    %1113 = vmatprep.subr.mxu0 0.0
    %v1114 = vand.u32 %v530, 4294901760
    %1115 = vmatpush1.msra.mxu0 %v1114
    %1116 = vmatprep.subr.mxu0 0.0
    %v1117 = vand.u32 %v529, 4294901760
    %1118 = vmatpush1.msra.mxu0 %v1117
    %1119 = vmatprep.subr.mxu0 0.0
    %v1120 = vand.u32 %v528, 4294901760
    %1121 = vmatpush1.msra.mxu0 %v1120
    %1122 = vmatprep.subr.mxu0 0.0
    %v1123 = vand.u32 %v527, 4294901760
    %1124 = vmatpush1.msra.mxu0 %v1123
    %1125 = vmatprep.subr.mxu0 0.0
    %v1126 = vand.u32 %v526, 4294901760
    %1127 = vmatpush1.msra.mxu0 %v1126
    %1128 = vmatprep.subr.mxu0 0.0
    %v1129 = vand.u32 %v525, 4294901760
    %1130 = vmatpush1.msra.mxu0 %v1129
    %1131 = vmatprep.subr.mxu0 0.0
    %v1132 = vand.u32 %v524, 4294901760
    %1133 = vmatpush1.msra.mxu0 %v1132
    %1134 = vmatprep.subr.mxu0 0.0
    %v1135 = vand.u32 %v523, 4294901760
    %1136 = vmatpush1.msra.mxu0 %v1135
    %1137 = vmatprep.subr.mxu0 0.0
    %v1138 = vand.u32 %v522, 4294901760
    %1139 = vmatpush1.msra.mxu0 %v1138
    %1140 = vmatprep.subr.mxu0 0.0
    %v1141 = vand.u32 %v521, 4294901760
    %1142 = vmatpush1.msra.mxu0 %v1141
    %1143 = vmatprep.subr.mxu0 0.0
    %1144 = vmatpush2.msra.mxu0 0.0
    %1145 = vmatprep.subr.mxu0 0.0
    %1146 = vmatpush2.msra.mxu0 0.0
    %1147 = vmatprep.subr.mxu0 0.0
    %1148 = vmatpush2.msra.mxu0 0.0
    %1149 = vmatprep.subr.mxu0 0.0
    %1150 = vmatpush2.msra.mxu0 0.0
    %1151 = vmatprep.subr.mxu0 0.0
    %1152 = vmatpush2.msra.mxu0 0.0
    %1153 = vmatprep.subr.mxu0 0.0
    %1154 = vmatpush2.msra.mxu0 0.0
    %1155 = vmatprep.subr.mxu0 0.0
    %1156 = vmatpush2.msra.mxu0 0.0
    %1157 = vmatprep.subr.mxu0 0.0
    %1158 = vmatpush2.msra.mxu0 0.0
    %1159 = vmatprep.subr.mxu0 0.0
    %1160 = vmatpush2.msra.mxu0 0.0
    %1161 = vmatprep.subr.mxu0 0.0
    %1162 = vmatpush2.msra.mxu0 0.0
    %1163 = vmatprep.subr.mxu0 0.0
    %1164 = vmatpush2.msra.mxu0 0.0
    %1165 = vmatprep.subr.mxu0 0.0
    %1166 = vmatpush2.msra.mxu0 0.0
    %1167 = vmatprep.subr.mxu0 0.0
    %1168 = vmatpush2.msra.mxu0 0.0
    %1169 = vmatprep.subr.mxu0 0.0
    %1170 = vmatpush2.msra.mxu0 0.0
    %1171 = vmatprep.subr.mxu0 0.0
    %1172 = vmatpush2.msra.mxu0 0.0
    %1173 = vmatprep.subr.mxu0 0.0
    %1174 = vmatpush2.msra.mxu0 0.0
    %1175 = vmatprep.mubr.f32.mxu0 0.0
    %v1176 = vand.u32 %v520, 4294901760
    %1177 = vmatmul.mubr.f32.gmra.mxu0 %v1176
    %v1178 = vpop.f32.mrf.mxu0
    %v1179 = vadd.f32 %v1092, %v1178
    %v1180 = vpop.f32.mrf.mxu0
    %1181 = vdwg.mxu0
    %v1182 = vmax.f32 %v1179, 0.0
    %v1183 = vld [vmem:[%s3] sm:$0xff]
    %v1184 = vld [vmem:[%s3 + $0x8] sm:$0xff]
    %v1185 = vld [vmem:[%s3 + $0x10] sm:$0xff]
    %v1186 = vld [vmem:[%s3 + $0x18] sm:$0xff]
    %v1187 = vld [vmem:[%s3 + $0x20] sm:$0xff]
    %v1188 = vld [vmem:[%s3 + $0x28] sm:$0xff]
    %v1189 = vld [vmem:[%s3 + $0x30] sm:$0xff]
    %v1190 = vld [vmem:[%s3 + $0x38] sm:$0xff]
    %v1191 = vld [vmem:[%s3 + $0x40] sm:$0xff]
    %v1192 = vld [vmem:[%s3 + $0x48] sm:$0xff]
    %v1193 = vld [vmem:[%s3 + $0x50] sm:$0xff]
    %v1194 = vld [vmem:[%s3 + $0x58] sm:$0xff]
    %v1195 = vld [vmem:[%s3 + $0x60] sm:$0xff]
    %v1196 = vld [vmem:[%s3 + $0x68] sm:$0xff]
    %v1197 = vld [vmem:[%s3 + $0x70] sm:$0xff]
    %v1198 = vld [vmem:[%s3 + $0x78] sm:$0xff]
    %v1199 = vlaneseq
    %v1200 = vshrl.u32 %v1199, 7
    %v1201 = vsub.s32 0, %v1200
    %v1202 = vrot.slane %v49, %v1201
    %1203 = vmatprep.subr.mxu0 0.0
    %v1204 = vand.u32 %v1198, 4294901760
    %1205 = vmatpush1.msra.mxu0 %v1204
    %1206 = vmatprep.subr.mxu0 0.0
    %v1207 = vand.u32 %v1197, 4294901760
    %1208 = vmatpush1.msra.mxu0 %v1207
    %1209 = vmatprep.subr.mxu0 0.0
    %v1210 = vand.u32 %v1196, 4294901760
    %1211 = vmatpush1.msra.mxu0 %v1210
    %1212 = vmatprep.subr.mxu0 0.0
    %v1213 = vand.u32 %v1195, 4294901760
    %1214 = vmatpush1.msra.mxu0 %v1213
    %1215 = vmatprep.subr.mxu0 0.0
    %v1216 = vand.u32 %v1194, 4294901760
    %1217 = vmatpush1.msra.mxu0 %v1216
    %1218 = vmatprep.subr.mxu0 0.0
    %v1219 = vand.u32 %v1193, 4294901760
    %1220 = vmatpush1.msra.mxu0 %v1219
    %1221 = vmatprep.subr.mxu0 0.0
    %v1222 = vand.u32 %v1192, 4294901760
    %1223 = vmatpush1.msra.mxu0 %v1222
    %1224 = vmatprep.subr.mxu0 0.0
    %v1225 = vand.u32 %v1191, 4294901760
    %1226 = vmatpush1.msra.mxu0 %v1225
    %1227 = vmatprep.subr.mxu0 0.0
    %v1228 = vand.u32 %v1190, 4294901760
    %1229 = vmatpush1.msra.mxu0 %v1228
    %1230 = vmatprep.subr.mxu0 0.0
    %v1231 = vand.u32 %v1189, 4294901760
    %1232 = vmatpush1.msra.mxu0 %v1231
    %1233 = vmatprep.subr.mxu0 0.0
    %v1234 = vand.u32 %v1188, 4294901760
    %1235 = vmatpush1.msra.mxu0 %v1234
    %1236 = vmatprep.subr.mxu0 0.0
    %v1237 = vand.u32 %v1187, 4294901760
    %1238 = vmatpush1.msra.mxu0 %v1237
    %1239 = vmatprep.subr.mxu0 0.0
    %v1240 = vand.u32 %v1186, 4294901760
    %1241 = vmatpush1.msra.mxu0 %v1240
    %1242 = vmatprep.subr.mxu0 0.0
    %v1243 = vand.u32 %v1185, 4294901760
    %1244 = vmatpush1.msra.mxu0 %v1243
    %1245 = vmatprep.subr.mxu0 0.0
    %v1246 = vand.u32 %v1184, 4294901760
    %1247 = vmatpush1.msra.mxu0 %v1246
    %1248 = vmatprep.subr.mxu0 0.0
    %v1249 = vand.u32 %v1183, 4294901760
    %1250 = vmatpush1.msra.mxu0 %v1249
    %1251 = vmatprep.subr.mxu0 0.0
    %1252 = vmatpush2.msra.mxu0 0.0
    %1253 = vmatprep.subr.mxu0 0.0
    %1254 = vmatpush2.msra.mxu0 0.0
    %1255 = vmatprep.subr.mxu0 0.0
    %1256 = vmatpush2.msra.mxu0 0.0
    %1257 = vmatprep.subr.mxu0 0.0
    %1258 = vmatpush2.msra.mxu0 0.0
    %1259 = vmatprep.subr.mxu0 0.0
    %1260 = vmatpush2.msra.mxu0 0.0
    %1261 = vmatprep.subr.mxu0 0.0
    %1262 = vmatpush2.msra.mxu0 0.0
    %1263 = vmatprep.subr.mxu0 0.0
    %1264 = vmatpush2.msra.mxu0 0.0
    %1265 = vmatprep.subr.mxu0 0.0
    %1266 = vmatpush2.msra.mxu0 0.0
    %1267 = vmatprep.subr.mxu0 0.0
    %1268 = vmatpush2.msra.mxu0 0.0
    %1269 = vmatprep.subr.mxu0 0.0
    %1270 = vmatpush2.msra.mxu0 0.0
    %1271 = vmatprep.subr.mxu0 0.0
    %1272 = vmatpush2.msra.mxu0 0.0
    %1273 = vmatprep.subr.mxu0 0.0
    %1274 = vmatpush2.msra.mxu0 0.0
    %1275 = vmatprep.subr.mxu0 0.0
    %1276 = vmatpush2.msra.mxu0 0.0
    %1277 = vmatprep.subr.mxu0 0.0
    %1278 = vmatpush2.msra.mxu0 0.0
    %1279 = vmatprep.subr.mxu0 0.0
    %1280 = vmatpush2.msra.mxu0 0.0
    %1281 = vmatprep.subr.mxu0 0.0
    %1282 = vmatpush2.msra.mxu0 0.0
    %1283 = vmatprep.mubr.f32.mxu0 0.0
    %v1284 = vand.u32 %v1182, 4294901760
    %v1285 = vsub.f32 %v1182, %v1284
    %v1286 = vand.u32 %v1285, 4294901760
    %v1287 = vsub.f32 %v1285, %v1286
    %v1288 = vand.u32 %v1287, 4294901760
    %1289 = vmatmul.mubr.f32.gmra.mxu0 %v1288
    %v1290 = vpop.f32.mrf.mxu0
    %v1291 = vadd.f32 %v1202, %v1290
    %v1292 = vpop.f32.mrf.mxu0
    %1293 = vdwg.mxu0
    %1294 = vmatprep.subr.mxu0 0.0
    %v1295 = vand.u32 %v1198, 4294901760
    %v1296 = vsub.f32 %v1198, %v1295
    %v1297 = vand.u32 %v1296, 4294901760
    %v1298 = vsub.f32 %v1296, %v1297
    %v1299 = vand.u32 %v1298, 4294901760
    %1300 = vmatpush1.msra.mxu0 %v1299
    %1301 = vmatprep.subr.mxu0 0.0
    %v1302 = vand.u32 %v1197, 4294901760
    %v1303 = vsub.f32 %v1197, %v1302
    %v1304 = vand.u32 %v1303, 4294901760
    %v1305 = vsub.f32 %v1303, %v1304
    %v1306 = vand.u32 %v1305, 4294901760
    %1307 = vmatpush1.msra.mxu0 %v1306
    %1308 = vmatprep.subr.mxu0 0.0
    %v1309 = vand.u32 %v1196, 4294901760
    %v1310 = vsub.f32 %v1196, %v1309
    %v1311 = vand.u32 %v1310, 4294901760
    %v1312 = vsub.f32 %v1310, %v1311
    %v1313 = vand.u32 %v1312, 4294901760
    %1314 = vmatpush1.msra.mxu0 %v1313
    %1315 = vmatprep.subr.mxu0 0.0
    %v1316 = vand.u32 %v1195, 4294901760
    %v1317 = vsub.f32 %v1195, %v1316
    %v1318 = vand.u32 %v1317, 4294901760
    %v1319 = vsub.f32 %v1317, %v1318
    %v1320 = vand.u32 %v1319, 4294901760
    %1321 = vmatpush1.msra.mxu0 %v1320
    %1322 = vmatprep.subr.mxu0 0.0
    %v1323 = vand.u32 %v1194, 4294901760
    %v1324 = vsub.f32 %v1194, %v1323
    %v1325 = vand.u32 %v1324, 4294901760
    %v1326 = vsub.f32 %v1324, %v1325
    %v1327 = vand.u32 %v1326, 4294901760
    %1328 = vmatpush1.msra.mxu0 %v1327
    %1329 = vmatprep.subr.mxu0 0.0
    %v1330 = vand.u32 %v1193, 4294901760
    %v1331 = vsub.f32 %v1193, %v1330
    %v1332 = vand.u32 %v1331, 4294901760
    %v1333 = vsub.f32 %v1331, %v1332
    %v1334 = vand.u32 %v1333, 4294901760
    %1335 = vmatpush1.msra.mxu0 %v1334
    %1336 = vmatprep.subr.mxu0 0.0
    %v1337 = vand.u32 %v1192, 4294901760
    %v1338 = vsub.f32 %v1192, %v1337
    %v1339 = vand.u32 %v1338, 4294901760
    %v1340 = vsub.f32 %v1338, %v1339
    %v1341 = vand.u32 %v1340, 4294901760
    %1342 = vmatpush1.msra.mxu0 %v1341
    %1343 = vmatprep.subr.mxu0 0.0
    %v1344 = vand.u32 %v1191, 4294901760
    %v1345 = vsub.f32 %v1191, %v1344
    %v1346 = vand.u32 %v1345, 4294901760
    %v1347 = vsub.f32 %v1345, %v1346
    %v1348 = vand.u32 %v1347, 4294901760
    %1349 = vmatpush1.msra.mxu0 %v1348
    %1350 = vmatprep.subr.mxu0 0.0
    %v1351 = vand.u32 %v1190, 4294901760
    %v1352 = vsub.f32 %v1190, %v1351
    %v1353 = vand.u32 %v1352, 4294901760
    %v1354 = vsub.f32 %v1352, %v1353
    %v1355 = vand.u32 %v1354, 4294901760
    %1356 = vmatpush1.msra.mxu0 %v1355
    %1357 = vmatprep.subr.mxu0 0.0
    %v1358 = vand.u32 %v1189, 4294901760
    %v1359 = vsub.f32 %v1189, %v1358
    %v1360 = vand.u32 %v1359, 4294901760
    %v1361 = vsub.f32 %v1359, %v1360
    %v1362 = vand.u32 %v1361, 4294901760
    %1363 = vmatpush1.msra.mxu0 %v1362
    %1364 = vmatprep.subr.mxu0 0.0
    %v1365 = vand.u32 %v1188, 4294901760
    %v1366 = vsub.f32 %v1188, %v1365
    %v1367 = vand.u32 %v1366, 4294901760
    %v1368 = vsub.f32 %v1366, %v1367
    %v1369 = vand.u32 %v1368, 4294901760
    %1370 = vmatpush1.msra.mxu0 %v1369
    %1371 = vmatprep.subr.mxu0 0.0
    %v1372 = vand.u32 %v1187, 4294901760
    %v1373 = vsub.f32 %v1187, %v1372
    %v1374 = vand.u32 %v1373, 4294901760
    %v1375 = vsub.f32 %v1373, %v1374
    %v1376 = vand.u32 %v1375, 4294901760
    %1377 = vmatpush1.msra.mxu0 %v1376
    %1378 = vmatprep.subr.mxu0 0.0
    %v1379 = vand.u32 %v1186, 4294901760
    %v1380 = vsub.f32 %v1186, %v1379
    %v1381 = vand.u32 %v1380, 4294901760
    %v1382 = vsub.f32 %v1380, %v1381
    %v1383 = vand.u32 %v1382, 4294901760
    %1384 = vmatpush1.msra.mxu0 %v1383
    %1385 = vmatprep.subr.mxu0 0.0
    %v1386 = vand.u32 %v1185, 4294901760
    %v1387 = vsub.f32 %v1185, %v1386
    %v1388 = vand.u32 %v1387, 4294901760
    %v1389 = vsub.f32 %v1387, %v1388
    %v1390 = vand.u32 %v1389, 4294901760
    %1391 = vmatpush1.msra.mxu0 %v1390
    %1392 = vmatprep.subr.mxu0 0.0
    %v1393 = vand.u32 %v1184, 4294901760
    %v1394 = vsub.f32 %v1184, %v1393
    %v1395 = vand.u32 %v1394, 4294901760
    %v1396 = vsub.f32 %v1394, %v1395
    %v1397 = vand.u32 %v1396, 4294901760
    %1398 = vmatpush1.msra.mxu0 %v1397
    %1399 = vmatprep.subr.mxu0 0.0
    %v1400 = vand.u32 %v1183, 4294901760
    %v1401 = vsub.f32 %v1183, %v1400
    %v1402 = vand.u32 %v1401, 4294901760
    %v1403 = vsub.f32 %v1401, %v1402
    %v1404 = vand.u32 %v1403, 4294901760
    %1405 = vmatpush1.msra.mxu0 %v1404
    %1406 = vmatprep.subr.mxu0 0.0
    %1407 = vmatpush2.msra.mxu0 0.0
    %1408 = vmatprep.subr.mxu0 0.0
    %1409 = vmatpush2.msra.mxu0 0.0
    %1410 = vmatprep.subr.mxu0 0.0
    %1411 = vmatpush2.msra.mxu0 0.0
    %1412 = vmatprep.subr.mxu0 0.0
    %1413 = vmatpush2.msra.mxu0 0.0
    %1414 = vmatprep.subr.mxu0 0.0
    %1415 = vmatpush2.msra.mxu0 0.0
    %1416 = vmatprep.subr.mxu0 0.0
    %1417 = vmatpush2.msra.mxu0 0.0
    %1418 = vmatprep.subr.mxu0 0.0
    %1419 = vmatpush2.msra.mxu0 0.0
    %1420 = vmatprep.subr.mxu0 0.0
    %1421 = vmatpush2.msra.mxu0 0.0
    %1422 = vmatprep.subr.mxu0 0.0
    %1423 = vmatpush2.msra.mxu0 0.0
    %1424 = vmatprep.subr.mxu0 0.0
    %1425 = vmatpush2.msra.mxu0 0.0
    %1426 = vmatprep.subr.mxu0 0.0
    %1427 = vmatpush2.msra.mxu0 0.0
    %1428 = vmatprep.subr.mxu0 0.0
    %1429 = vmatpush2.msra.mxu0 0.0
    %1430 = vmatprep.subr.mxu0 0.0
    %1431 = vmatpush2.msra.mxu0 0.0
    %1432 = vmatprep.subr.mxu0 0.0
    %1433 = vmatpush2.msra.mxu0 0.0
    %1434 = vmatprep.subr.mxu0 0.0
    %1435 = vmatpush2.msra.mxu0 0.0
    %1436 = vmatprep.subr.mxu0 0.0
    %1437 = vmatpush2.msra.mxu0 0.0
    %1438 = vmatprep.mubr.f32.mxu0 0.0
    %v1439 = vand.u32 %v1182, 4294901760
    %1440 = vmatmul.mubr.f32.gmra.mxu0 %v1439
    %v1441 = vpop.f32.mrf.mxu0
    %v1442 = vadd.f32 %v1291, %v1441
    %v1443 = vpop.f32.mrf.mxu0
    %1444 = vdwg.mxu0
    %1445 = vmatprep.subr.mxu0 0.0
    %v1446 = vand.u32 %v1198, 4294901760
    %v1447 = vsub.f32 %v1198, %v1446
    %1448 = vmatpush1.msra.mxu0 %v1447
    %1449 = vmatprep.subr.mxu0 0.0
    %v1450 = vand.u32 %v1197, 4294901760
    %v1451 = vsub.f32 %v1197, %v1450
    %1452 = vmatpush1.msra.mxu0 %v1451
    %1453 = vmatprep.subr.mxu0 0.0
    %v1454 = vand.u32 %v1196, 4294901760
    %v1455 = vsub.f32 %v1196, %v1454
    %1456 = vmatpush1.msra.mxu0 %v1455
    %1457 = vmatprep.subr.mxu0 0.0
    %v1458 = vand.u32 %v1195, 4294901760
    %v1459 = vsub.f32 %v1195, %v1458
    %1460 = vmatpush1.msra.mxu0 %v1459
    %1461 = vmatprep.subr.mxu0 0.0
    %v1462 = vand.u32 %v1194, 4294901760
    %v1463 = vsub.f32 %v1194, %v1462
    %1464 = vmatpush1.msra.mxu0 %v1463
    %1465 = vmatprep.subr.mxu0 0.0
    %v1466 = vand.u32 %v1193, 4294901760
    %v1467 = vsub.f32 %v1193, %v1466
    %1468 = vmatpush1.msra.mxu0 %v1467
    %1469 = vmatprep.subr.mxu0 0.0
    %v1470 = vand.u32 %v1192, 4294901760
    %v1471 = vsub.f32 %v1192, %v1470
    %1472 = vmatpush1.msra.mxu0 %v1471
    %1473 = vmatprep.subr.mxu0 0.0
    %v1474 = vand.u32 %v1191, 4294901760
    %v1475 = vsub.f32 %v1191, %v1474
    %1476 = vmatpush1.msra.mxu0 %v1475
    %1477 = vmatprep.subr.mxu0 0.0
    %v1478 = vand.u32 %v1190, 4294901760
    %v1479 = vsub.f32 %v1190, %v1478
    %1480 = vmatpush1.msra.mxu0 %v1479
    %1481 = vmatprep.subr.mxu0 0.0
    %v1482 = vand.u32 %v1189, 4294901760
    %v1483 = vsub.f32 %v1189, %v1482
    %1484 = vmatpush1.msra.mxu0 %v1483
    %1485 = vmatprep.subr.mxu0 0.0
    %v1486 = vand.u32 %v1188, 4294901760
    %v1487 = vsub.f32 %v1188, %v1486
    %1488 = vmatpush1.msra.mxu0 %v1487
    %1489 = vmatprep.subr.mxu0 0.0
    %v1490 = vand.u32 %v1187, 4294901760
    %v1491 = vsub.f32 %v1187, %v1490
    %1492 = vmatpush1.msra.mxu0 %v1491
    %1493 = vmatprep.subr.mxu0 0.0
    %v1494 = vand.u32 %v1186, 4294901760
    %v1495 = vsub.f32 %v1186, %v1494
    %1496 = vmatpush1.msra.mxu0 %v1495
    %1497 = vmatprep.subr.mxu0 0.0
    %v1498 = vand.u32 %v1185, 4294901760
    %v1499 = vsub.f32 %v1185, %v1498
    %1500 = vmatpush1.msra.mxu0 %v1499
    %1501 = vmatprep.subr.mxu0 0.0
    %v1502 = vand.u32 %v1184, 4294901760
    %v1503 = vsub.f32 %v1184, %v1502
    %1504 = vmatpush1.msra.mxu0 %v1503
    %1505 = vmatprep.subr.mxu0 0.0
    %v1506 = vand.u32 %v1183, 4294901760
    %v1507 = vsub.f32 %v1183, %v1506
    %1508 = vmatpush1.msra.mxu0 %v1507
    %1509 = vmatprep.subr.mxu0 0.0
    %1510 = vmatpush2.msra.mxu0 0.0
    %1511 = vmatprep.subr.mxu0 0.0
    %1512 = vmatpush2.msra.mxu0 0.0
    %1513 = vmatprep.subr.mxu0 0.0
    %1514 = vmatpush2.msra.mxu0 0.0
    %1515 = vmatprep.subr.mxu0 0.0
    %1516 = vmatpush2.msra.mxu0 0.0
    %1517 = vmatprep.subr.mxu0 0.0
    %1518 = vmatpush2.msra.mxu0 0.0
    %1519 = vmatprep.subr.mxu0 0.0
    %1520 = vmatpush2.msra.mxu0 0.0
    %1521 = vmatprep.subr.mxu0 0.0
    %1522 = vmatpush2.msra.mxu0 0.0
    %1523 = vmatprep.subr.mxu0 0.0
    %1524 = vmatpush2.msra.mxu0 0.0
    %1525 = vmatprep.subr.mxu0 0.0
    %1526 = vmatpush2.msra.mxu0 0.0
    %1527 = vmatprep.subr.mxu0 0.0
    %1528 = vmatpush2.msra.mxu0 0.0
    %1529 = vmatprep.subr.mxu0 0.0
    %1530 = vmatpush2.msra.mxu0 0.0
    %1531 = vmatprep.subr.mxu0 0.0
    %1532 = vmatpush2.msra.mxu0 0.0
    %1533 = vmatprep.subr.mxu0 0.0
    %1534 = vmatpush2.msra.mxu0 0.0
    %1535 = vmatprep.subr.mxu0 0.0
    %1536 = vmatpush2.msra.mxu0 0.0
    %1537 = vmatprep.subr.mxu0 0.0
    %1538 = vmatpush2.msra.mxu0 0.0
    %1539 = vmatprep.subr.mxu0 0.0
    %1540 = vmatpush2.msra.mxu0 0.0
    %1541 = vmatprep.mubr.f32.mxu0 0.0
    %v1542 = vand.u32 %v1182, 4294901760
    %v1543 = vsub.f32 %v1182, %v1542
    %1544 = vmatmul.mubr.f32.gmra.mxu0 %v1543
    %v1545 = vpop.f32.mrf.mxu0
    %v1546 = vadd.f32 %v1442, %v1545
    %v1547 = vpop.f32.mrf.mxu0
    %1548 = vdwg.mxu0
    %1549 = vmatprep.subr.mxu0 0.0
    %v1550 = vand.u32 %v1198, 4294901760
    %1551 = vmatpush1.msra.mxu0 %v1550
    %1552 = vmatprep.subr.mxu0 0.0
    %v1553 = vand.u32 %v1197, 4294901760
    %1554 = vmatpush1.msra.mxu0 %v1553
    %1555 = vmatprep.subr.mxu0 0.0
    %v1556 = vand.u32 %v1196, 4294901760
    %1557 = vmatpush1.msra.mxu0 %v1556
    %1558 = vmatprep.subr.mxu0 0.0
    %v1559 = vand.u32 %v1195, 4294901760
    %1560 = vmatpush1.msra.mxu0 %v1559
    %1561 = vmatprep.subr.mxu0 0.0
    %v1562 = vand.u32 %v1194, 4294901760
    %1563 = vmatpush1.msra.mxu0 %v1562
    %1564 = vmatprep.subr.mxu0 0.0
    %v1565 = vand.u32 %v1193, 4294901760
    %1566 = vmatpush1.msra.mxu0 %v1565
    %1567 = vmatprep.subr.mxu0 0.0
    %v1568 = vand.u32 %v1192, 4294901760
    %1569 = vmatpush1.msra.mxu0 %v1568
    %1570 = vmatprep.subr.mxu0 0.0
    %v1571 = vand.u32 %v1191, 4294901760
    %1572 = vmatpush1.msra.mxu0 %v1571
    %1573 = vmatprep.subr.mxu0 0.0
    %v1574 = vand.u32 %v1190, 4294901760
    %1575 = vmatpush1.msra.mxu0 %v1574
    %1576 = vmatprep.subr.mxu0 0.0
    %v1577 = vand.u32 %v1189, 4294901760
    %1578 = vmatpush1.msra.mxu0 %v1577
    %1579 = vmatprep.subr.mxu0 0.0
    %v1580 = vand.u32 %v1188, 4294901760
    %1581 = vmatpush1.msra.mxu0 %v1580
    %1582 = vmatprep.subr.mxu0 0.0
    %v1583 = vand.u32 %v1187, 4294901760
    %1584 = vmatpush1.msra.mxu0 %v1583
    %1585 = vmatprep.subr.mxu0 0.0
    %v1586 = vand.u32 %v1186, 4294901760
    %1587 = vmatpush1.msra.mxu0 %v1586
    %1588 = vmatprep.subr.mxu0 0.0
    %v1589 = vand.u32 %v1185, 4294901760
    %1590 = vmatpush1.msra.mxu0 %v1589
    %1591 = vmatprep.subr.mxu0 0.0
    %v1592 = vand.u32 %v1184, 4294901760
    %1593 = vmatpush1.msra.mxu0 %v1592
    %1594 = vmatprep.subr.mxu0 0.0
    %v1595 = vand.u32 %v1183, 4294901760
    %1596 = vmatpush1.msra.mxu0 %v1595
    %1597 = vmatprep.subr.mxu0 0.0
    %1598 = vmatpush2.msra.mxu0 0.0
    %1599 = vmatprep.subr.mxu0 0.0
    %1600 = vmatpush2.msra.mxu0 0.0
    %1601 = vmatprep.subr.mxu0 0.0
    %1602 = vmatpush2.msra.mxu0 0.0
    %1603 = vmatprep.subr.mxu0 0.0
    %1604 = vmatpush2.msra.mxu0 0.0
    %1605 = vmatprep.subr.mxu0 0.0
    %1606 = vmatpush2.msra.mxu0 0.0
    %1607 = vmatprep.subr.mxu0 0.0
    %1608 = vmatpush2.msra.mxu0 0.0
    %1609 = vmatprep.subr.mxu0 0.0
    %1610 = vmatpush2.msra.mxu0 0.0
    %1611 = vmatprep.subr.mxu0 0.0
    %1612 = vmatpush2.msra.mxu0 0.0
    %1613 = vmatprep.subr.mxu0 0.0
    %1614 = vmatpush2.msra.mxu0 0.0
    %1615 = vmatprep.subr.mxu0 0.0
    %1616 = vmatpush2.msra.mxu0 0.0
    %1617 = vmatprep.subr.mxu0 0.0
    %1618 = vmatpush2.msra.mxu0 0.0
    %1619 = vmatprep.subr.mxu0 0.0
    %1620 = vmatpush2.msra.mxu0 0.0
    %1621 = vmatprep.subr.mxu0 0.0
    %1622 = vmatpush2.msra.mxu0 0.0
    %1623 = vmatprep.subr.mxu0 0.0
    %1624 = vmatpush2.msra.mxu0 0.0
    %1625 = vmatprep.subr.mxu0 0.0
    %1626 = vmatpush2.msra.mxu0 0.0
    %1627 = vmatprep.subr.mxu0 0.0
    %1628 = vmatpush2.msra.mxu0 0.0
    %1629 = vmatprep.mubr.f32.mxu0 0.0
    %v1630 = vand.u32 %v1182, 4294901760
    %v1631 = vsub.f32 %v1182, %v1630
    %v1632 = vand.u32 %v1631, 4294901760
    %1633 = vmatmul.mubr.f32.gmra.mxu0 %v1632
    %v1634 = vpop.f32.mrf.mxu0
    %v1635 = vadd.f32 %v1546, %v1634
    %v1636 = vpop.f32.mrf.mxu0
    %1637 = vdwg.mxu0
    %1638 = vmatprep.subr.mxu0 0.0
    %v1639 = vand.u32 %v1198, 4294901760
    %v1640 = vsub.f32 %v1198, %v1639
    %v1641 = vand.u32 %v1640, 4294901760
    %1642 = vmatpush1.msra.mxu0 %v1641
    %1643 = vmatprep.subr.mxu0 0.0
    %v1644 = vand.u32 %v1197, 4294901760
    %v1645 = vsub.f32 %v1197, %v1644
    %v1646 = vand.u32 %v1645, 4294901760
    %1647 = vmatpush1.msra.mxu0 %v1646
    %1648 = vmatprep.subr.mxu0 0.0
    %v1649 = vand.u32 %v1196, 4294901760
    %v1650 = vsub.f32 %v1196, %v1649
    %v1651 = vand.u32 %v1650, 4294901760
    %1652 = vmatpush1.msra.mxu0 %v1651
    %1653 = vmatprep.subr.mxu0 0.0
    %v1654 = vand.u32 %v1195, 4294901760
    %v1655 = vsub.f32 %v1195, %v1654
    %v1656 = vand.u32 %v1655, 4294901760
    %1657 = vmatpush1.msra.mxu0 %v1656
    %1658 = vmatprep.subr.mxu0 0.0
    %v1659 = vand.u32 %v1194, 4294901760
    %v1660 = vsub.f32 %v1194, %v1659
    %v1661 = vand.u32 %v1660, 4294901760
    %1662 = vmatpush1.msra.mxu0 %v1661
    %1663 = vmatprep.subr.mxu0 0.0
    %v1664 = vand.u32 %v1193, 4294901760
    %v1665 = vsub.f32 %v1193, %v1664
    %v1666 = vand.u32 %v1665, 4294901760
    %1667 = vmatpush1.msra.mxu0 %v1666
    %1668 = vmatprep.subr.mxu0 0.0
    %v1669 = vand.u32 %v1192, 4294901760
    %v1670 = vsub.f32 %v1192, %v1669
    %v1671 = vand.u32 %v1670, 4294901760
    %1672 = vmatpush1.msra.mxu0 %v1671
    %1673 = vmatprep.subr.mxu0 0.0
    %v1674 = vand.u32 %v1191, 4294901760
    %v1675 = vsub.f32 %v1191, %v1674
    %v1676 = vand.u32 %v1675, 4294901760
    %1677 = vmatpush1.msra.mxu0 %v1676
    %1678 = vmatprep.subr.mxu0 0.0
    %v1679 = vand.u32 %v1190, 4294901760
    %v1680 = vsub.f32 %v1190, %v1679
    %v1681 = vand.u32 %v1680, 4294901760
    %1682 = vmatpush1.msra.mxu0 %v1681
    %1683 = vmatprep.subr.mxu0 0.0
    %v1684 = vand.u32 %v1189, 4294901760
    %v1685 = vsub.f32 %v1189, %v1684
    %v1686 = vand.u32 %v1685, 4294901760
    %1687 = vmatpush1.msra.mxu0 %v1686
    %1688 = vmatprep.subr.mxu0 0.0
    %v1689 = vand.u32 %v1188, 4294901760
    %v1690 = vsub.f32 %v1188, %v1689
    %v1691 = vand.u32 %v1690, 4294901760
    %1692 = vmatpush1.msra.mxu0 %v1691
    %1693 = vmatprep.subr.mxu0 0.0
    %v1694 = vand.u32 %v1187, 4294901760
    %v1695 = vsub.f32 %v1187, %v1694
    %v1696 = vand.u32 %v1695, 4294901760
    %1697 = vmatpush1.msra.mxu0 %v1696
    %1698 = vmatprep.subr.mxu0 0.0
    %v1699 = vand.u32 %v1186, 4294901760
    %v1700 = vsub.f32 %v1186, %v1699
    %v1701 = vand.u32 %v1700, 4294901760
    %1702 = vmatpush1.msra.mxu0 %v1701
    %1703 = vmatprep.subr.mxu0 0.0
    %v1704 = vand.u32 %v1185, 4294901760
    %v1705 = vsub.f32 %v1185, %v1704
    %v1706 = vand.u32 %v1705, 4294901760
    %1707 = vmatpush1.msra.mxu0 %v1706
    %1708 = vmatprep.subr.mxu0 0.0
    %v1709 = vand.u32 %v1184, 4294901760
    %v1710 = vsub.f32 %v1184, %v1709
    %v1711 = vand.u32 %v1710, 4294901760
    %1712 = vmatpush1.msra.mxu0 %v1711
    %1713 = vmatprep.subr.mxu0 0.0
    %v1714 = vand.u32 %v1183, 4294901760
    %v1715 = vsub.f32 %v1183, %v1714
    %v1716 = vand.u32 %v1715, 4294901760
    %1717 = vmatpush1.msra.mxu0 %v1716
    %1718 = vmatprep.subr.mxu0 0.0
    %1719 = vmatpush2.msra.mxu0 0.0
    %1720 = vmatprep.subr.mxu0 0.0
    %1721 = vmatpush2.msra.mxu0 0.0
    %1722 = vmatprep.subr.mxu0 0.0
    %1723 = vmatpush2.msra.mxu0 0.0
    %1724 = vmatprep.subr.mxu0 0.0
    %1725 = vmatpush2.msra.mxu0 0.0
    %1726 = vmatprep.subr.mxu0 0.0
    %1727 = vmatpush2.msra.mxu0 0.0
    %1728 = vmatprep.subr.mxu0 0.0
    %1729 = vmatpush2.msra.mxu0 0.0
    %1730 = vmatprep.subr.mxu0 0.0
    %1731 = vmatpush2.msra.mxu0 0.0
    %1732 = vmatprep.subr.mxu0 0.0
    %1733 = vmatpush2.msra.mxu0 0.0
    %1734 = vmatprep.subr.mxu0 0.0
    %1735 = vmatpush2.msra.mxu0 0.0
    %1736 = vmatprep.subr.mxu0 0.0
    %1737 = vmatpush2.msra.mxu0 0.0
    %1738 = vmatprep.subr.mxu0 0.0
    %1739 = vmatpush2.msra.mxu0 0.0
    %1740 = vmatprep.subr.mxu0 0.0
    %1741 = vmatpush2.msra.mxu0 0.0
    %1742 = vmatprep.subr.mxu0 0.0
    %1743 = vmatpush2.msra.mxu0 0.0
    %1744 = vmatprep.subr.mxu0 0.0
    %1745 = vmatpush2.msra.mxu0 0.0
    %1746 = vmatprep.subr.mxu0 0.0
    %1747 = vmatpush2.msra.mxu0 0.0
    %1748 = vmatprep.subr.mxu0 0.0
    %1749 = vmatpush2.msra.mxu0 0.0
    %1750 = vmatprep.mubr.f32.mxu0 0.0
    %v1751 = vand.u32 %v1182, 4294901760
    %1752 = vmatmul.mubr.f32.gmra.mxu0 %v1751
    %v1753 = vpop.f32.mrf.mxu0
    %v1754 = vadd.f32 %v1635, %v1753
    %v1755 = vpop.f32.mrf.mxu0
    %1756 = vdwg.mxu0
    %1757 = vmatprep.subr.mxu0 0.0
    %v1758 = vand.u32 %v1198, 4294901760
    %1759 = vmatpush1.msra.mxu0 %v1758
    %1760 = vmatprep.subr.mxu0 0.0
    %v1761 = vand.u32 %v1197, 4294901760
    %1762 = vmatpush1.msra.mxu0 %v1761
    %1763 = vmatprep.subr.mxu0 0.0
    %v1764 = vand.u32 %v1196, 4294901760
    %1765 = vmatpush1.msra.mxu0 %v1764
    %1766 = vmatprep.subr.mxu0 0.0
    %v1767 = vand.u32 %v1195, 4294901760
    %1768 = vmatpush1.msra.mxu0 %v1767
    %1769 = vmatprep.subr.mxu0 0.0
    %v1770 = vand.u32 %v1194, 4294901760
    %1771 = vmatpush1.msra.mxu0 %v1770
    %1772 = vmatprep.subr.mxu0 0.0
    %v1773 = vand.u32 %v1193, 4294901760
    %1774 = vmatpush1.msra.mxu0 %v1773
    %1775 = vmatprep.subr.mxu0 0.0
    %v1776 = vand.u32 %v1192, 4294901760
    %1777 = vmatpush1.msra.mxu0 %v1776
    %1778 = vmatprep.subr.mxu0 0.0
    %v1779 = vand.u32 %v1191, 4294901760
    %1780 = vmatpush1.msra.mxu0 %v1779
    %1781 = vmatprep.subr.mxu0 0.0
    %v1782 = vand.u32 %v1190, 4294901760
    %1783 = vmatpush1.msra.mxu0 %v1782
    %1784 = vmatprep.subr.mxu0 0.0
    %v1785 = vand.u32 %v1189, 4294901760
    %1786 = vmatpush1.msra.mxu0 %v1785
    %1787 = vmatprep.subr.mxu0 0.0
    %v1788 = vand.u32 %v1188, 4294901760
    %1789 = vmatpush1.msra.mxu0 %v1788
    %1790 = vmatprep.subr.mxu0 0.0
    %v1791 = vand.u32 %v1187, 4294901760
    %1792 = vmatpush1.msra.mxu0 %v1791
    %1793 = vmatprep.subr.mxu0 0.0
    %v1794 = vand.u32 %v1186, 4294901760
    %1795 = vmatpush1.msra.mxu0 %v1794
    %1796 = vmatprep.subr.mxu0 0.0
    %v1797 = vand.u32 %v1185, 4294901760
    %1798 = vmatpush1.msra.mxu0 %v1797
    %1799 = vmatprep.subr.mxu0 0.0
    %v1800 = vand.u32 %v1184, 4294901760
    %1801 = vmatpush1.msra.mxu0 %v1800
    %1802 = vmatprep.subr.mxu0 0.0
    %v1803 = vand.u32 %v1183, 4294901760
    %1804 = vmatpush1.msra.mxu0 %v1803
    %1805 = vmatprep.subr.mxu0 0.0
    %1806 = vmatpush2.msra.mxu0 0.0
    %1807 = vmatprep.subr.mxu0 0.0
    %1808 = vmatpush2.msra.mxu0 0.0
    %1809 = vmatprep.subr.mxu0 0.0
    %1810 = vmatpush2.msra.mxu0 0.0
    %1811 = vmatprep.subr.mxu0 0.0
    %1812 = vmatpush2.msra.mxu0 0.0
    %1813 = vmatprep.subr.mxu0 0.0
    %1814 = vmatpush2.msra.mxu0 0.0
    %1815 = vmatprep.subr.mxu0 0.0
    %1816 = vmatpush2.msra.mxu0 0.0
    %1817 = vmatprep.subr.mxu0 0.0
    %1818 = vmatpush2.msra.mxu0 0.0
    %1819 = vmatprep.subr.mxu0 0.0
    %1820 = vmatpush2.msra.mxu0 0.0
    %1821 = vmatprep.subr.mxu0 0.0
    %1822 = vmatpush2.msra.mxu0 0.0
    %1823 = vmatprep.subr.mxu0 0.0
    %1824 = vmatpush2.msra.mxu0 0.0
    %1825 = vmatprep.subr.mxu0 0.0
    %1826 = vmatpush2.msra.mxu0 0.0
    %1827 = vmatprep.subr.mxu0 0.0
    %1828 = vmatpush2.msra.mxu0 0.0
    %1829 = vmatprep.subr.mxu0 0.0
    %1830 = vmatpush2.msra.mxu0 0.0
    %1831 = vmatprep.subr.mxu0 0.0
    %1832 = vmatpush2.msra.mxu0 0.0
    %1833 = vmatprep.subr.mxu0 0.0
    %1834 = vmatpush2.msra.mxu0 0.0
    %1835 = vmatprep.subr.mxu0 0.0
    %1836 = vmatpush2.msra.mxu0 0.0
    %1837 = vmatprep.mubr.f32.mxu0 0.0
    %v1838 = vand.u32 %v1182, 4294901760
    %1839 = vmatmul.mubr.f32.gmra.mxu0 %v1838
    %v1840 = vpop.f32.mrf.mxu0
    %v1841 = vadd.f32 %v1754, %v1840
    %v1842 = vpop.f32.mrf.mxu0
    %1843 = vdwg.mxu0
    %v1844 = vtanh.pop %v1841
    %v1845 = vlaneseq
    %v1846 = vshrl.u32 %v1845, 7
    %v1847 = vsub.s32 0, %v1846
    %v1848 = vrot.slane %v50, %v1847
    %v1849 = vmul.f32 %v1844, %v1848
    %v1850 = vadd.f32 %v1849, %v1848
    %vm1851 = vcmask 31744
    %1852 = vst.msk [vmem:[%s5] sm:$0xff] %vm1851, %v1850
    // Predicated region
    $region30: #{actor_forward.1} parent=1 // pred_check
      _
    $region31: #{actor_forward.1} parent=1 // pred_check_branch
      %1854 = sbr.rel (0) target = $region33
    $region32: #{actor_forward.1} parent=1 // pred_region
      _
    $region33: #{actor_forward.1} parent=1 // pred_fallthru
      _
    // Predicated region
    $region34: #{actor_forward.1} parent=1 // pred_check
      _
    $region35: #{actor_forward.1} parent=1 // pred_check_branch
      %1856 = sbr.rel (0) target = $region37
    $region36: #{actor_forward.1} parent=1 // pred_region
      _
    $region37: #{actor_forward.1} parent=1 // pred_fallthru
      _
    %1857 = vsyncpa [#allocation3], 1
    %1858 = vsyncpa [#allocation5], 1

</llo_original>
